<compile_context>
chip_gen: v6e
topology: v6e:2x2x1
jax: 0.10.0
libtpu: 0.0.40
codegen_flags: <defaults>
</compile_context>

<pallas_src>
import math
import jax
import jax.numpy as jnp
from jax.experimental import pallas as pl
from jax.experimental.pallas import tpu as pltpu


def _linear_ae_kernel(x_ref, w1_ref, b1_ref, w2_ref, b2_ref, o_ref):
    # x_ref:  [TN, d]   w1_ref: [d, nb]   b1_ref: [1, nb]
    # w2_ref: [nb, TD]  b2_ref: [1, TD]   o_ref:  [TN, TD]
    h = jnp.dot(x_ref[...], w1_ref[...], preferred_element_type=jnp.float32)
    h = h + b1_ref[...]
    out = jnp.dot(h.astype(x_ref.dtype), w2_ref[...],
                  preferred_element_type=jnp.float32)
    out = out + b2_ref[...]
    o_ref[...] = out.astype(o_ref.dtype)


def _vmem_limit_bytes():
    """Generation-aware scoped-VMEM budget (~75% of per-core VMEM, capped)."""
    try:
        cap = int(pltpu.get_tpu_info().vmem_capacity_bytes)
    except Exception:
        cap = 64 * 1024 * 1024          # conservative (v7x-sized) fallback
    cap = max(cap, 32 * 1024 * 1024)
    # v5e/v6e (128 MiB) -> 96 MiB; v7x (64 MiB per TC) -> 48 MiB.
    return min((cap * 3) // 4, 100 * 1024 * 1024)


def _pick_tile_n(n, d, nb, vmem_limit, itemsize=4):
    """Row tile: as large as the VMEM budget allows (<= ~8 MiB per buffer)."""
    weight_bytes = (2 * d * nb + d + nb) * itemsize
    # Budget: 4 pipelined I/O buffers (x, out double-buffered) + ~1 f32 temp,
    # plus a few MiB of headroom for compiler-internal scratch.
    avail = max(vmem_limit - weight_bytes - (4 << 20), 4 << 20)
    tile_bytes = min(avail // 5, 8 << 20)
    tn = max(8, (tile_bytes // max(1, d * itemsize)) // 8 * 8)
    if n <= tn:
        return n            # one block spanning the full batch dim (always legal)
    return tn


def _pick_tile_d(d, n_tiles, target_steps=4):
    """Split the output-feature axis when the batch grid alone is too short."""
    if n_tiles >= target_steps or d < 256:
        return d
    d_tiles = min(pl.cdiv(target_steps, n_tiles), max(1, d // 128))
    td = pl.cdiv(pl.cdiv(d, d_tiles), 128) * 128
    return max(128, min(td, d))


def _build_call(n, d, nb, tn, td, vmem_limit, out_dtype, single_buffer_invariant):
    n_tiles = pl.cdiv(n, tn)
    d_tiles = pl.cdiv(d, td)

    def invariant_spec(shape):
        # Grid-invariant operand: no need for a second pipeline buffer.
        if single_buffer_invariant:
            return pl.BlockSpec(shape, lambda i, j: (0, 0),
                                pipeline_mode=pl.Buffered(1))
        return pl.BlockSpec(shape, lambda i, j: (0, 0))

    if d_tiles == 1:
        w2_spec = invariant_spec((nb, td))
        b2_spec = invariant_spec((1, td))
    else:
        w2_spec = pl.BlockSpec((nb, td), lambda i, j: (0, j))
        b2_spec = pl.BlockSpec((1, td), lambda i, j: (0, j))

    return pl.pallas_call(
        _linear_ae_kernel,
        out_shape=jax.ShapeDtypeStruct((n, d), out_dtype),
        grid_spec=pltpu.PrefetchScalarGridSpec(
            num_scalar_prefetch=0,
            grid=(n_tiles, d_tiles),
            in_specs=[
                pl.BlockSpec((tn, d), lambda i, j: (i, 0)),   # x rows (pipelined)
                invariant_spec((d, nb)),                      # W1^T resident
                invariant_spec((1, nb)),                      # b1 resident
                w2_spec,                                      # W2^T (d-tiled)
                b2_spec,                                      # b2 (d-tiled)
            ],
            out_specs=pl.BlockSpec((tn, td), lambda i, j: (i, j)),
        ),
        compiler_params=pltpu.CompilerParams(
            dimension_semantics=("parallel", "parallel"),
            vmem_limit_bytes=vmem_limit,
        ),
    )


def linear_ae_pallas(x2d, w1t, b1_2d, w2t, b2_2d):
    """x2d: [N, d], w1t: [d, nb], b1_2d: [1, nb], w2t: [nb, d], b2_2d: [1, d]."""
    n, d = x2d.shape
    d1, nb = w1t.shape
    assert d1 == d and w2t.shape == (nb, d)

    vmem_limit = _vmem_limit_bytes()
    itemsize = jnp.dtype(x2d.dtype).itemsize
    tn = _pick_tile_n(n, d, nb, vmem_limit, itemsize)
    td = _pick_tile_d(d, pl.cdiv(n, tn))

    try:
        fn = _build_call(n, d, nb, tn, td, vmem_limit, x2d.dtype, True)
        return fn(x2d, w1t, b1_2d, w2t, b2_2d)
    except Exception:
        # Fallback: default double-buffering on all operands (negligible VMEM
        # cost at small nb); guarantees the kernel still compiles and runs.
        fn = _build_call(n, d, nb, tn, td, vmem_limit, x2d.dtype, False)
        return fn(x2d, w1t, b1_2d, w2t, b2_2d)


class LinearAEPallas:
    """JAX/Pallas equivalent of the PyTorch `LinearAE` module."""

    def __init__(self, d, n_bottleneck, key):
        self.d = d
        self.nb = n_bottleneck
        k1w, k1b, k2w, k2b = jax.random.split(key, 4)

        # nn.Linear default init: U(-1/sqrt(in_features), 1/sqrt(in_features))
        bound1 = 1.0 / math.sqrt(d)
        w1 = jax.random.uniform(k1w, (n_bottleneck, d), jnp.float32,
                                minval=-bound1, maxval=bound1)
        b1 = jax.random.uniform(k1b, (n_bottleneck,), jnp.float32,
                                minval=-bound1, maxval=bound1)

        bound2 = 1.0 / math.sqrt(n_bottleneck)
        w2 = jax.random.uniform(k2w, (d, n_bottleneck), jnp.float32,
                                minval=-bound2, maxval=bound2)
        b2 = jax.random.uniform(k2b, (d,), jnp.float32,
                                minval=-bound2, maxval=bound2)

        # Keep originals for the reference check.
        self.w1, self.b1, self.w2, self.b2 = w1, b1, w2, b2
        # Hoisted kernel layouts (transpose / reshape once at init, not per call).
        self.w1t = jnp.asarray(w1.T)                 # [d, nb]
        self.b1_2d = b1.reshape(1, n_bottleneck)     # [1, nb]
        self.w2t = jnp.asarray(w2.T)                 # [nb, d]
        self.b2_2d = b2.reshape(1, d)                # [1, d]

    def __call__(self, x, y=None):
        shape = x.shape
        x2d = x.reshape(shape[0], -1)                # nn.Flatten()
        assert x2d.shape[1] == self.d
        out = linear_ae_pallas(x2d, self.w1t, self.b1_2d, self.w2t, self.b2_2d)
        return out.reshape(shape)                    # .view(shape)


if __name__ == "__main__":
    key = jax.random.PRNGKey(0)
    k_param, k_x = jax.random.split(key)

    # Small shapes implied by the module: x is NCHW, d = C*H*W, small bottleneck.
    batch, channels, spatial = 2, 4, 16
    d = channels * spatial * spatial     # 1024 (lane-dense: multiple of 128)
    n_bottleneck = 32

    model = LinearAEPallas(d, n_bottleneck, k_param)

    x = jax.random.normal(k_x, (batch, channels, spatial, spatial), dtype=jnp.float32)

    out = model(x)
    out = jax.block_until_ready(out)
    assert out.shape == x.shape

    # Correctness check against a plain JAX reference (high-precision matmuls).
    x2d = x.reshape(batch, -1)
    h_ref = jnp.dot(x2d, model.w1.T, precision=jax.lax.Precision.HIGHEST) + model.b1
    ref = jnp.dot(h_ref, model.w2.T, precision=jax.lax.Precision.HIGHEST) + model.b2
    ref = ref.reshape(x.shape)
    assert jnp.allclose(out, ref, atol=1e-3, rtol=1e-3), (
        float(jnp.max(jnp.abs(out - ref))))

    print("KERNEL_OK")
</pallas_src>

<mosaic_0001>
module attributes {stable_mosaic.version = 11 : i64} {
  func.func @_linear_ae_kernel(%arg0: i32, %arg1: i32, %arg2: memref<2x1024xf32, #tpu.memory_space<vmem>>, %arg3: memref<1024x32xf32, #tpu.memory_space<vmem>>, %arg4: memref<1x32xf32, #tpu.memory_space<vmem>>, %arg5: memref<32x256xf32, #tpu.memory_space<vmem>>, %arg6: memref<1x256xf32, #tpu.memory_space<vmem>>, %arg7: memref<2x256xf32, #tpu.memory_space<vmem>>) attributes {dimension_semantics = [#tpu.dimension_semantics<parallel>, #tpu.dimension_semantics<parallel>], iteration_bounds = array<i64: 1, 4>, scalar_prefetch = 0 : i64, scratch_operands = 0 : i64, tpu.core_type = #tpu.core_type<tc>, window_params = [{transform_indices = @transform_0, window_bounds = array<i64: 2, 1024>}, {pipeline_mode = #tpu.pipeline_mode<synchronous>, transform_indices = @transform_1, window_bounds = array<i64: 1024, 32>}, {pipeline_mode = #tpu.pipeline_mode<synchronous>, transform_indices = @transform_2, window_bounds = array<i64: 1, 32>}, {transform_indices = @transform_3, window_bounds = array<i64: 32, 256>}, {transform_indices = @transform_4, window_bounds = array<i64: 1, 256>}, {transform_indices = @transform_5, window_bounds = array<i64: 2, 256>}]} {
    %c0 = arith.constant 0 : index
    %c0_0 = arith.constant 0 : index
    %0 = vector.load %arg2[%c0, %c0_0] : memref<2x1024xf32, #tpu.memory_space<vmem>>, vector<2x1024xf32>
    %c0_1 = arith.constant 0 : index
    %c0_2 = arith.constant 0 : index
    %1 = vector.load %arg3[%c0_1, %c0_2] : memref<1024x32xf32, #tpu.memory_space<vmem>>, vector<1024x32xf32>
    %cst = arith.constant dense<0.000000e+00> : vector<2x32xf32>
    %2 = tpu.matmul %0, %1, %cst {dimension_numbers = #tpu.dot_dimension_numbers<[1], [0], [0], [1], [0, 0, 1, 1], [], []>} : vector<2x1024xf32>, vector<1024x32xf32>, vector<2x32xf32> -> vector<2x32xf32>
    %c0_3 = arith.constant 0 : index
    %c0_4 = arith.constant 0 : index
    %3 = vector.load %arg4[%c0_3, %c0_4] : memref<1x32xf32, #tpu.memory_space<vmem>>, vector<1x32xf32>
    %4 = vector.broadcast %3 : vector<1x32xf32> to vector<2x32xf32>
    %5 = arith.addf %2, %4 : vector<2x32xf32>
    %c0_5 = arith.constant 0 : index
    %c0_6 = arith.constant 0 : index
    %6 = vector.load %arg5[%c0_5, %c0_6] : memref<32x256xf32, #tpu.memory_space<vmem>>, vector<32x256xf32>
    %cst_7 = arith.constant dense<0.000000e+00> : vector<2x256xf32>
    %7 = tpu.matmul %5, %6, %cst_7 {dimension_numbers = #tpu.dot_dimension_numbers<[1], [0], [0], [1], [0, 0, 1, 1], [], []>} : vector<2x32xf32>, vector<32x256xf32>, vector<2x256xf32> -> vector<2x256xf32>
    %c0_8 = arith.constant 0 : index
    %c0_9 = arith.constant 0 : index
    %8 = vector.load %arg6[%c0_8, %c0_9] : memref<1x256xf32, #tpu.memory_space<vmem>>, vector<1x256xf32>
    %9 = vector.broadcast %8 : vector<1x256xf32> to vector<2x256xf32>
    %10 = arith.addf %7, %9 : vector<2x256xf32>
    %c0_10 = arith.constant 0 : index
    %c0_11 = arith.constant 0 : index
    %11 = vector.load %arg7[%c0_10, %c0_11] : memref<2x256xf32, #tpu.memory_space<vmem>>, vector<2x256xf32>
    tpu.vector_store %arg7[%c0_10, %c0_11], %10 {strides = array<i32>} : memref<2x256xf32, #tpu.memory_space<vmem>>, vector<2x256xf32>,
    return
  }
  func.func @transform_0(%arg0: i32, %arg1: i32) -> (i32, i32) {
    %c0_i32 = arith.constant 0 : i32
    %c0_i32_0 = arith.constant 0 : i32
    return %arg0, %c0_i32 : i32, i32
  }
  func.func @transform_1(%arg0: i32, %arg1: i32) -> (i32, i32) {
    %c0_i32 = arith.constant 0 : i32
    %c0_i32_0 = arith.constant 0 : i32
    %c0_i32_1 = arith.constant 0 : i32
    return %c0_i32, %c0_i32_0 : i32, i32
  }
  func.func @transform_2(%arg0: i32, %arg1: i32) -> (i32, i32) {
    %c0_i32 = arith.constant 0 : i32
    %c0_i32_0 = arith.constant 0 : i32
    %c0_i32_1 = arith.constant 0 : i32
    return %c0_i32, %c0_i32_0 : i32, i32
  }
  func.func @transform_3(%arg0: i32, %arg1: i32) -> (i32, i32) {
    %c0_i32 = arith.constant 0 : i32
    %c0_i32_0 = arith.constant 0 : i32
    return %c0_i32, %arg1 : i32, i32
  }
  func.func @transform_4(%arg0: i32, %arg1: i32) -> (i32, i32) {
    %c0_i32 = arith.constant 0 : i32
    %c0_i32_0 = arith.constant 0 : i32
    return %c0_i32, %arg1 : i32, i32
  }
  func.func @transform_5(%arg0: i32, %arg1: i32) -> (i32, i32) {
    %c0_i32 = arith.constant 0 : i32
    return %arg0, %arg1 : i32, i32
  }
}

module attributes {stable_mosaic.version = 11 : i64} {
  func.func @_linear_ae_kernel(%arg0: i32, %arg1: i32, %arg2: memref<2x1024xf32, #tpu.memory_space<vmem>>, %arg3: memref<1024x32xf32, #tpu.memory_space<vmem>>, %arg4: memref<1x32xf32, #tpu.memory_space<vmem>>, %arg5: memref<32x256xf32, #tpu.memory_space<vmem>>, %arg6: memref<1x256xf32, #tpu.memory_space<vmem>>, %arg7: memref<2x256xf32, #tpu.memory_space<vmem>>) attributes {dimension_semantics = [#tpu.dimension_semantics<parallel>, #tpu.dimension_semantics<parallel>], iteration_bounds = array<i64: 1, 4>, scalar_prefetch = 0 : i64, scratch_operands = 0 : i64, tpu.core_type = #tpu.core_type<tc>, window_params = [{transform_indices = @transform_0, window_bounds = array<i64: 2, 1024>}, {pipeline_mode = #tpu.pipeline_mode<synchronous>, transform_indices = @transform_1, window_bounds = array<i64: 1024, 32>}, {pipeline_mode = #tpu.pipeline_mode<synchronous>, transform_indices = @transform_2, window_bounds = array<i64: 1, 32>}, {transform_indices = @transform_3, window_bounds = array<i64: 32, 256>}, {transform_indices = @transform_4, window_bounds = array<i64: 1, 256>}, {transform_indices = @transform_5, window_bounds = array<i64: 2, 256>}]} {
    %c0 = arith.constant 0 : index
    %c0_0 = arith.constant 0 : index
    %0 = vector.load %arg2[%c0, %c0_0] : memref<2x1024xf32, #tpu.memory_space<vmem>>, vector<2x1024xf32>
    %c0_1 = arith.constant 0 : index
    %c0_2 = arith.constant 0 : index
    %1 = vector.load %arg3[%c0_1, %c0_2] : memref<1024x32xf32, #tpu.memory_space<vmem>>, vector<1024x32xf32>
    %cst = arith.constant dense<0.000000e+00> : vector<2x32xf32>
    %2 = tpu.matmul %0, %1, %cst {dimension_numbers = #tpu.dot_dimension_numbers<[1], [0], [0], [1], [0, 0, 1, 1], [], []>} : vector<2x1024xf32>, vector<1024x32xf32>, vector<2x32xf32> -> vector<2x32xf32>
    %c0_3 = arith.constant 0 : index
    %c0_4 = arith.constant 0 : index
    %3 = vector.load %arg4[%c0_3, %c0_4] : memref<1x32xf32, #tpu.memory_space<vmem>>, vector<1x32xf32>
    %4 = vector.broadcast %3 : vector<1x32xf32> to vector<2x32xf32>
    %5 = arith.addf %2, %4 : vector<2x32xf32>
    %c0_5 = arith.constant 0 : index
    %c0_6 = arith.constant 0 : index
    %6 = vector.load %arg5[%c0_5, %c0_6] : memref<32x256xf32, #tpu.memory_space<vmem>>, vector<32x256xf32>
    %cst_7 = arith.constant dense<0.000000e+00> : vector<2x256xf32>
    %7 = tpu.matmul %5, %6, %cst_7 {dimension_numbers = #tpu.dot_dimension_numbers<[1], [0], [0], [1], [0, 0, 1, 1], [], []>} : vector<2x32xf32>, vector<32x256xf32>, vector<2x256xf32> -> vector<2x256xf32>
    %c0_8 = arith.constant 0 : index
    %c0_9 = arith.constant 0 : index
    %8 = vector.load %arg6[%c0_8, %c0_9] : memref<1x256xf32, #tpu.memory_space<vmem>>, vector<1x256xf32>
    %9 = vector.broadcast %8 : vector<1x256xf32> to vector<2x256xf32>
    %10 = arith.addf %7, %9 : vector<2x256xf32>
    %c0_10 = arith.constant 0 : index
    %c0_11 = arith.constant 0 : index
    %11 = vector.load %arg7[%c0_10, %c0_11] : memref<2x256xf32, #tpu.memory_space<vmem>>, vector<2x256xf32>
    tpu.vector_store %arg7[%c0_10, %c0_11], %10 {strides = array<i32>} : memref<2x256xf32, #tpu.memory_space<vmem>>, vector<2x256xf32>,
    return
  }
  func.func @transform_0(%arg0: i32, %arg1: i32) -> (i32, i32) {
    %c0_i32 = arith.constant 0 : i32
    %c0_i32_0 = arith.constant 0 : i32
    return %arg0, %c0_i32 : i32, i32
  }
  func.func @transform_1(%arg0: i32, %arg1: i32) -> (i32, i32) {
    %c0_i32 = arith.constant 0 : i32
    %c0_i32_0 = arith.constant 0 : i32
    %c0_i32_1 = arith.constant 0 : i32
    return %c0_i32, %c0_i32_0 : i32, i32
  }
  func.func @transform_2(%arg0: i32, %arg1: i32) -> (i32, i32) {
    %c0_i32 = arith.constant 0 : i32
    %c0_i32_0 = arith.constant 0 : i32
    %c0_i32_1 = arith.constant 0 : i32
    return %c0_i32, %c0_i32_0 : i32, i32
  }
  func.func @transform_3(%arg0: i32, %arg1: i32) -> (i32, i32) {
    %c0_i32 = arith.constant 0 : i32
    %c0_i32_0 = arith.constant 0 : i32
    return %c0_i32, %arg1 : i32, i32
  }
  func.func @transform_4(%arg0: i32, %arg1: i32) -> (i32, i32) {
    %c0_i32 = arith.constant 0 : i32
    %c0_i32_0 = arith.constant 0 : i32
    return %c0_i32, %arg1 : i32, i32
  }
  func.func @transform_5(%arg0: i32, %arg1: i32) -> (i32, i32) {
    %c0_i32 = arith.constant 0 : i32
    return %arg0, %arg1 : i32, i32
  }
}

</mosaic_0001>

<llo_original>
// kernel: tpu_custom_call.1
$region0: #{tpu_custom_call.1}
  #allocation0 [shape = 'u32[]', space=smem, size = 0x4, offset = 0x4, fixed_abs, tag = 'smem constant byte address 0x4 - core index']
  #allocation1 [shape = 'u32[144,128]{1,0:T(1,128)}', space=vmem, size = 0x12000, scoped, tag = 'internal scratch']
  %s0 = inlined_call_operand.vmem [shape: f32[2,1024], index: 0, kind: input, shape index: {}]
  %s1 = inlined_call_operand.vmem [shape: f32[1024,32], index: 1, kind: input, shape index: {}]
  %s2 = inlined_call_operand.vmem [shape: f32[1,32], index: 2, kind: input, shape index: {}]
  %s3 = inlined_call_operand.vmem [shape: f32[32,1024], index: 3, kind: input, shape index: {}]
  %s4 = inlined_call_operand.vmem [shape: f32[1,1024], index: 4, kind: input, shape index: {}]
  %s5 = inlined_call_operand.hbm [shape: f32[2,1024], index: 5, kind: output, shape index: {}]
  %s6 = sld [smem:[#allocation0]]
  $region76: #{tpu_custom_call.1} parent=0
    _
  %s8 = ssub.s32 1, %s6
  %s9 = scalar_select 0, %s8, %s6
  $region1: #{tpu_custom_call.1} parent=0
    #allocation2 [shape = 'u8[65536]{0}', space=vmem, size = 0x10000, scoped, tag = 'input window, operand 3']
    #allocation3 [shape = 'u8[4096]{0}', space=vmem, size = 0x1000, scoped, tag = 'output window, operand 0']
    #allocation4 [shape = 's32[2]{0}', space=sflag, size = 0x8, scoped, tag = 'scoped memory for tpu_custom_call.1']
    %10 = vsyncpa [#allocation4], 0
    %s11 = scalar_lea.sflag [#allocation4], 1
    %12 = vsyncpa %s11, 0
    loop: start=0, step=1, limit=6
    $region2: #{tpu_custom_call.1} parent=1 // loop_pre_header
      _
    $region3: #{tpu_custom_call.1} parent=1 // loop_header
      %s14 = sphi 0, %s18
      %p15 = scmp.ge.s32.totalorder %s14, 6
      %s21 = sphi 0, %s33
      %s22 = sphi 0, %s29
      %s23 = sphi 0, %s21
      %s24 = sphi 0, %s22
      %s25 = sphi 0, %s23
      %s26 = sphi 0, %s24
      %s36 = sphi 0, %s38
      %s39 = sphi 0, %s36
      %s40 = sphi 0, %s39
      %s56 = sphi 0, %s40
      %s60 = sphi 0, %s60
      %s62 = sphi 0, %s60
      %s63 = sphi 0, %s62
      %s77 = sphi 0, %s63
      %s81 = sphi 0, %s81
      %s83 = sphi 0, %s81
      %s84 = sphi 0, %s83
      %s98 = sphi 0, %s84
      %s104 = sphi 0, %s106
      %s107 = sphi 0, %s104
      %s108 = sphi 0, %s107
      %s124 = sphi 0, %s108
      %s130 = sphi 0, %s132
      %s133 = sphi 0, %s130
      %s134 = sphi 0, %s133
      %s150 = sphi 0, %s134
      %s158 = sphi 0, %s160
      %s161 = sphi 0, %s158
      %s162 = sphi 0, %s161
      %s178 = sphi 0, %s162
    $region4: #{tpu_custom_call.1} parent=1 // loop_header_branch
      %17 = sbr.rel (%p15) target = $region8
    $region5: #{tpu_custom_call.1} parent=1 // loop_body
      %s19 = ssub.s32 %s14, 1
      %s20 = ssub.s32 %s14, 2
      %s27 = sadd.s32 1, %s22
      %p28 = scmp.ge.s32.totalorder %s27, 4
      %s29 = scalar_select %p28, 0, %s27
      %s30 = sadd.s32 1, %s21
      %s31 = scalar_select %p28, %s30, %s21
      %p32 = scmp.ge.s32.totalorder %s31, 1
      %s33 = scalar_select %p32, 0, %s31
      %s34 = ssub.s32 %s21, %s33
      %p35 = scmp.eq.s32.totalorder %s34, 0
      %s37 = sadd.s32 %s36, 1
      %s38 = scalar_select %p35, %s36, %s37
      %p41 = pneg %p35
      %p42 = scmp.eq.s32.totalorder %s14, 3
      %p43 = por %p41, %p42
      %p44 = scmp.ne.s32.totalorder %s36, %s39
      %p45 = scmp.eq.s32.totalorder %s14, 0
      %p46 = por %p44, %p45
      %p47 = scmp.ne.s32.totalorder %s36, %s39
      %p48 = scmp.eq.s32.totalorder %s19, 3
      %p49 = por %p47, %p48
      %p50 = scmp.ne.s32.totalorder %s39, %s40
      %p51 = scmp.eq.s32.totalorder %s19, 0
      %p52 = por %p50, %p51
      %p53 = scmp.ne.s32.totalorder %s39, %s40
      %p54 = scmp.eq.s32.totalorder %s20, 3
      %p55 = por %p53, %p54
      %p57 = scmp.ne.s32.totalorder %s40, %s56
      %p58 = scmp.eq.s32.totalorder %s20, 0
      %p59 = por %p57, %p58
      %s61 = sadd.s32 %s60, 1
      %p64 = scmp.eq.s32.totalorder %s14, 3
      %p65 = scmp.ne.s32.totalorder %s60, %s62
      %p66 = scmp.eq.s32.totalorder %s14, 0
      %p67 = por %p65, %p66
      %p68 = scmp.ne.s32.totalorder %s60, %s62
      %p69 = scmp.eq.s32.totalorder %s19, 3
      %p70 = por %p68, %p69
      %p71 = scmp.ne.s32.totalorder %s62, %s63
      %p72 = scmp.eq.s32.totalorder %s19, 0
      %p73 = por %p71, %p72
      %p74 = scmp.ne.s32.totalorder %s62, %s63
      %p75 = scmp.eq.s32.totalorder %s20, 3
      %p76 = por %p74, %p75
      %p78 = scmp.ne.s32.totalorder %s63, %s77
      %p79 = scmp.eq.s32.totalorder %s20, 0
      %p80 = por %p78, %p79
      %s82 = sadd.s32 %s81, 1
      %p85 = scmp.eq.s32.totalorder %s14, 3
      %p86 = scmp.ne.s32.totalorder %s81, %s83
      %p87 = scmp.eq.s32.totalorder %s14, 0
      %p88 = por %p86, %p87
      %p89 = scmp.ne.s32.totalorder %s81, %s83
      %p90 = scmp.eq.s32.totalorder %s19, 3
      %p91 = por %p89, %p90
      %p92 = scmp.ne.s32.totalorder %s83, %s84
      %p93 = scmp.eq.s32.totalorder %s19, 0
      %p94 = por %p92, %p93
      %p95 = scmp.ne.s32.totalorder %s83, %s84
      %p96 = scmp.eq.s32.totalorder %s20, 3
      %p97 = por %p95, %p96
      %p99 = scmp.ne.s32.totalorder %s84, %s98
      %p100 = scmp.eq.s32.totalorder %s20, 0
      %p101 = por %p99, %p100
      %s102 = ssub.s32 %s22, %s29
      %p103 = scmp.eq.s32.totalorder %s102, 0
      %s105 = sadd.s32 %s104, 1
      %s106 = scalar_select %p103, %s104, %s105
      %p109 = pneg %p103
      %p110 = scmp.eq.s32.totalorder %s14, 3
      %p111 = por %p109, %p110
      %p112 = scmp.ne.s32.totalorder %s104, %s107
      %p113 = scmp.eq.s32.totalorder %s14, 0
      %p114 = por %p112, %p113
      %p115 = scmp.ne.s32.totalorder %s104, %s107
      %p116 = scmp.eq.s32.totalorder %s19, 3
      %p117 = por %p115, %p116
      %p118 = scmp.ne.s32.totalorder %s107, %s108
      %p119 = scmp.eq.s32.totalorder %s19, 0
      %p120 = por %p118, %p119
      %p121 = scmp.ne.s32.totalorder %s107, %s108
      %p122 = scmp.eq.s32.totalorder %s20, 3
      %p123 = por %p121, %p122
      %p125 = scmp.ne.s32.totalorder %s108, %s124
      %p126 = scmp.eq.s32.totalorder %s20, 0
      %p127 = por %p125, %p126
      %s128 = ssub.s32 %s22, %s29
      %p129 = scmp.eq.s32.totalorder %s128, 0
      %s131 = sadd.s32 %s130, 1
      %s132 = scalar_select %p129, %s130, %s131
      %p135 = pneg %p129
      %p136 = scmp.eq.s32.totalorder %s14, 3
      %p137 = por %p135, %p136
      %p138 = scmp.ne.s32.totalorder %s130, %s133
      %p139 = scmp.eq.s32.totalorder %s14, 0
      %p140 = por %p138, %p139
      %p141 = scmp.ne.s32.totalorder %s130, %s133
      %p142 = scmp.eq.s32.totalorder %s19, 3
      %p143 = por %p141, %p142
      %p144 = scmp.ne.s32.totalorder %s133, %s134
      %p145 = scmp.eq.s32.totalorder %s19, 0
      %p146 = por %p144, %p145
      %p147 = scmp.ne.s32.totalorder %s133, %s134
      %p148 = scmp.eq.s32.totalorder %s20, 3
      %p149 = por %p147, %p148
      %p151 = scmp.ne.s32.totalorder %s134, %s150
      %p152 = scmp.eq.s32.totalorder %s20, 0
      %p153 = por %p151, %p152
      %s154 = ssub.s32 %s21, %s33
      %s155 = ssub.s32 %s22, %s29
      %s156 = sor.u32 %s154, %s155
      %p157 = scmp.eq.s32.totalorder %s156, 0
      %s159 = sadd.s32 %s158, 1
      %s160 = scalar_select %p157, %s158, %s159
      %p163 = pneg %p157
      %p164 = scmp.eq.s32.totalorder %s14, 3
      %p165 = por %p163, %p164
      %p166 = scmp.ne.s32.totalorder %s158, %s161
      %p167 = scmp.eq.s32.totalorder %s14, 0
      %p168 = por %p166, %p167
      %p169 = scmp.ne.s32.totalorder %s158, %s161
      %p170 = scmp.eq.s32.totalorder %s19, 3
      %p171 = por %p169, %p170
      %p172 = scmp.ne.s32.totalorder %s161, %s162
      %p173 = scmp.eq.s32.totalorder %s19, 0
      %p174 = por %p172, %p173
      %p175 = scmp.ne.s32.totalorder %s161, %s162
      %p176 = scmp.eq.s32.totalorder %s20, 3
      %p177 = por %p175, %p176
      %p179 = scmp.ne.s32.totalorder %s162, %s178
      %p180 = scmp.eq.s32.totalorder %s20, 0
      %p181 = por %p179, %p180
      %p182 = scmp.le.s32.totalorder 1, %s14
      %p183 = scmp.lt.s32.totalorder %s14, 5
      %p184 = pnand %p182, %p183
      %p185 = pneg %p184
      // Predicated region
      $region9: #{tpu_custom_call.1} parent=5 // pred_check
        _
      $region10: #{tpu_custom_call.1} parent=5 // pred_check_branch
        %187 = sbr.rel (%p184) target = $region12
      $region11: #{tpu_custom_call.1} parent=5 // pred_region
        %s188 = ssub.s32 %s14, 1
        // Predicated region
        $region13: #{tpu_custom_call.1} parent=11 // pred_check
          %p189 = pneg %p52
        $region14: #{tpu_custom_call.1} parent=11 // pred_check_branch
          %191 = sbr.rel (%p189) target = $region16
        $region15: #{tpu_custom_call.1} parent=11 // pred_region
          %p192 = scmp.lt.s32.totalorder %s23, 0
          %s193 = scalar_select %p192, %s23, 0
          %s194 = smul.addr %s193, 8
          %s195 = smul.addr %s194, 2
          %s196 = scalar_lea.vmem %s0, %s195
        $region16: #{tpu_custom_call.1} parent=11 // pred_fallthru
          _
        // Predicated region
        $region17: #{tpu_custom_call.1} parent=11 // pred_check
          %p197 = pneg %p73
        $region18: #{tpu_custom_call.1} parent=11 // pred_check_branch
          %199 = sbr.rel (%p197) target = $region20
        $region19: #{tpu_custom_call.1} parent=11 // pred_region
          _
        $region20: #{tpu_custom_call.1} parent=11 // pred_fallthru
          _
        // Predicated region
        $region21: #{tpu_custom_call.1} parent=11 // pred_check
          %p200 = pneg %p94
        $region22: #{tpu_custom_call.1} parent=11 // pred_check_branch
          %202 = sbr.rel (%p200) target = $region24
        $region23: #{tpu_custom_call.1} parent=11 // pred_region
          _
        $region24: #{tpu_custom_call.1} parent=11 // pred_fallthru
          _
      $region12: #{tpu_custom_call.1} parent=5 // pred_fallthru
        _
      %p203 = scmp.lt.s32.totalorder %s14, 4
      // Predicated region
      $region25: #{tpu_custom_call.1} parent=5 // pred_check
        %p204 = pneg %p203
      $region26: #{tpu_custom_call.1} parent=5 // pred_check_branch
        %206 = sbr.rel (%p204) target = $region28
      $region27: #{tpu_custom_call.1} parent=5 // pred_region
        // Predicated region
        $region29: #{tpu_custom_call.1} parent=27 // pred_check
          %p207 = pneg %p114
        $region30: #{tpu_custom_call.1} parent=27 // pred_check_branch
          %209 = sbr.rel (%p207) target = $region32
        $region31: #{tpu_custom_call.1} parent=27 // pred_region
          %s210 = sand.u32 %s104, 1
          %s211 = sand.u32 %s104, 1
          %s212 = smul.addr %s211, 64
          %s213 = scalar_lea.vmem [#allocation2], %s212
          %s214 = smul.u32 2, %s22
          %s215 = smul.addr %s214, 8
          %s216 = scalar_lea.vmem %s3, %s215
          // Predicated region
          $region33: #{tpu_custom_call.1} parent=31 // pred_check
            _
          $region34: #{tpu_custom_call.1} parent=31 // pred_check_branch
            %218 = sbr.rel (0) target = $region36
          $region35: #{tpu_custom_call.1} parent=31 // pred_region
            // Predicated region
            $region37: #{tpu_custom_call.1} parent=35 // pred_check
              _
            $region38: #{tpu_custom_call.1} parent=35 // pred_check_branch
              %220 = sbr.rel (0) target = $region40
            $region39: #{tpu_custom_call.1} parent=35 // pred_region
              loop: start=0, step=1, limit=1
              $region41: #{tpu_custom_call.1} parent=39 // loop_pre_header
                _
              $region42: #{tpu_custom_call.1} parent=39 // loop_header
                %s222 = sphi 0, %s226
                %p223 = scmp.ge.s32.totalorder %s222, 1
                %s227 = sphi %s216, %s216
                %s228 = sphi %s213, %s213
              $region43: #{tpu_custom_call.1} parent=39 // loop_header_branch
                %225 = sbr.rel (%p223) target = $region47
              $region44: #{tpu_custom_call.1} parent=39 // loop_body
                %v229 = vld [vmem:[%s227] sm:$0xff]
                %230 = vst [vmem:[%s228] sm:$0xff] %v229
                %v231 = vld [vmem:[%s227 + $0x8] sm:$0xff]
                %232 = vst [vmem:[%s228 + $0x8] sm:$0xff] %v231
                %v233 = vld [vmem:[%s227 + $0x40] sm:$0xff]
                %234 = vst [vmem:[%s228 + $0x10] sm:$0xff] %v233
                %v235 = vld [vmem:[%s227 + $0x48] sm:$0xff]
                %236 = vst [vmem:[%s228 + $0x18] sm:$0xff] %v235
                %v237 = vld [vmem:[%s227 + $0x80] sm:$0xff]
                %238 = vst [vmem:[%s228 + $0x20] sm:$0xff] %v237
                %v239 = vld [vmem:[%s227 + $0x88] sm:$0xff]
                %240 = vst [vmem:[%s228 + $0x28] sm:$0xff] %v239
                %v241 = vld [vmem:[%s227 + $0xc0] sm:$0xff]
                %242 = vst [vmem:[%s228 + $0x30] sm:$0xff] %v241
                %v243 = vld [vmem:[%s227 + $0xc8] sm:$0xff]
                %244 = vst [vmem:[%s228 + $0x38] sm:$0xff] %v243
              $region45: #{tpu_custom_call.1} parent=39 // loop_footer
                %s226 = sadd.s32 1, %s222
              $region46: #{tpu_custom_call.1} parent=39 // loop_footer_branch
                %221 = sbr.rel target = $region42
              $region47: #{tpu_custom_call.1} parent=39 // loop_exit
                _
            $region40: #{tpu_custom_call.1} parent=35 // pred_fallthru
              _
            // Predicated region
            $region48: #{tpu_custom_call.1} parent=35 // pred_check
              _
            $region49: #{tpu_custom_call.1} parent=35 // pred_check_branch
              %246 = sbr.rel target = $region51
            $region50: #{tpu_custom_call.1} parent=35 // pred_region
              _
            $region51: #{tpu_custom_call.1} parent=35 // pred_fallthru
              _
          $region36: #{tpu_custom_call.1} parent=31 // pred_fallthru
            _
          %247 = vnop
        $region32: #{tpu_custom_call.1} parent=27 // pred_fallthru
          _
        // Predicated region
        $region52: #{tpu_custom_call.1} parent=27 // pred_check
          %p248 = pneg %p140
        $region53: #{tpu_custom_call.1} parent=27 // pred_check_branch
          %250 = sbr.rel (%p248) target = $region55
        $region54: #{tpu_custom_call.1} parent=27 // pred_region
          %s251 = smul.u32 2, %s22
          %p252 = scmp.lt.s32.totalorder %s251, 7
          %s253 = scalar_select %p252, %s251, 7
          %s254 = scalar_lea.vmem %s4, %s253
          %s255 = smul.u32 2, %s22
        $region55: #{tpu_custom_call.1} parent=27 // pred_fallthru
          _
      $region28: #{tpu_custom_call.1} parent=5 // pred_fallthru
        _
      %p256 = scmp.le.s32.totalorder 1, %s14
      %p257 = scmp.lt.s32.totalorder %s14, 5
      %p258 = pnand %p256, %p257
      %p259 = pneg %p258
      // Predicated region
      $region56: #{tpu_custom_call.1} parent=5 // pred_check
        _
      $region57: #{tpu_custom_call.1} parent=5 // pred_check_branch
        %261 = sbr.rel (%p258) target = $region59
      $region58: #{tpu_custom_call.1} parent=5 // pred_region
        %s262 = ssub.s32 %s14, 1
        %s263 = sand.u32 %s107, 1
        %s264 = sand.u32 %s107, 1
        %s265 = smul.addr %s264, 64
        %s266 = scalar_lea.vmem [#allocation2], %s265
        // Predicated region
        $region60: #{tpu_custom_call.1} parent=58 // pred_check
          %p267 = pneg %p120
        $region61: #{tpu_custom_call.1} parent=58 // pred_check_branch
          %269 = sbr.rel (%p267) target = $region63
        $region62: #{tpu_custom_call.1} parent=58 // pred_region
          _
        $region63: #{tpu_custom_call.1} parent=58 // pred_fallthru
          _
        %p270 = scmp.lt.s32.totalorder %s23, 0
        %s271 = scalar_select %p270, %s23, 0
        %s272 = smul.addr %s271, 8
        %s273 = smul.addr %s272, 2
        %s274 = scalar_lea.vmem %s0, %s273
        %p275 = pneg %p52
        %p276 = pneg %p49
        %p277 = pneg %p73
        %p278 = pneg %p70
        %p279 = pneg %p94
        %p280 = pneg %p91
        %s281 = sand.u32 %s107, 1
        %s282 = sand.u32 %s107, 1
        %s283 = smul.addr %s282, 64
        %s284 = scalar_lea.vmem [#allocation2], %s283
        %p285 = pneg %p120
        %p286 = pneg %p117
        %s287 = smul.u32 2, %s24
        %p288 = scmp.lt.s32.totalorder %s287, 7
        %s289 = scalar_select %p288, %s287, 7
        %s290 = scalar_lea.vmem %s4, %s289
        %p291 = pneg %p146
        %p292 = pneg %p143
        %p293 = pneg %p174
        %p294 = pneg %p171
        %s295 = sand.u32 %s161, 1
        %s296 = scalar_lea.sflag [#allocation4], %s295
        %s297 = sand.u32 %s161, 1
        %s298 = smul.addr %s297, 4
        %s299 = scalar_lea.vmem [#allocation3], %s298
        %p300 = scmp.lt.s32.totalorder %s23, 0
        %s301 = scalar_select %p300, %s23, 0
        %s302 = smul.addr %s301, 8
        %s303 = smul.addr %s302, 2
        %s304 = scalar_lea.vmem %s0, %s303
        %s305 = smul.u32 2, %s24
        %s306 = smul.u32 2, %s24
        %p307 = scmp.lt.s32.totalorder %s306, 7
        %s308 = scalar_select %p307, %s306, 7
        %s309 = scalar_lea.vmem %s4, %s308
        %s310 = smul.u32 2, %s24
        %s311 = smul.u32 2, %s24
        %v312 = vld [vmem:[%s304] sm:$0xff]
        %v313 = vld [vmem:[%s304 + $0x8] sm:$0xff]
        %v314 = vld [vmem:[%s1] sm:$0xff]
        %v315 = vld [vmem:[%s1 + $0x8] sm:$0xff]
        %v316 = vld [vmem:[%s1 + $0x10] sm:$0xff]
        %v317 = vld [vmem:[%s1 + $0x18] sm:$0xff]
        %v318 = vld [vmem:[%s1 + $0x20] sm:$0xff]
        %v319 = vld [vmem:[%s1 + $0x28] sm:$0xff]
        %v320 = vld [vmem:[%s1 + $0x30] sm:$0xff]
        %v321 = vld [vmem:[%s1 + $0x38] sm:$0xff]
        %v322 = vld [vmem:[%s1 + $0x40] sm:$0xff]
        %v323 = vld [vmem:[%s1 + $0x48] sm:$0xff]
        %v324 = vld [vmem:[%s1 + $0x50] sm:$0xff]
        %v325 = vld [vmem:[%s1 + $0x58] sm:$0xff]
        %v326 = vld [vmem:[%s1 + $0x60] sm:$0xff]
        %v327 = vld [vmem:[%s1 + $0x68] sm:$0xff]
        %v328 = vld [vmem:[%s1 + $0x70] sm:$0xff]
        %v329 = vld [vmem:[%s1 + $0x78] sm:$0xff]
        %v330 = vld [vmem:[%s1 + $0x80] sm:$0xff]
        %v331 = vld [vmem:[%s1 + $0x88] sm:$0xff]
        %v332 = vld [vmem:[%s1 + $0x90] sm:$0xff]
        %v333 = vld [vmem:[%s1 + $0x98] sm:$0xff]
        %v334 = vld [vmem:[%s1 + $0xa0] sm:$0xff]
        %v335 = vld [vmem:[%s1 + $0xa8] sm:$0xff]
        %v336 = vld [vmem:[%s1 + $0xb0] sm:$0xff]
        %v337 = vld [vmem:[%s1 + $0xb8] sm:$0xff]
        %v338 = vld [vmem:[%s1 + $0xc0] sm:$0xff]
        %v339 = vld [vmem:[%s1 + $0xc8] sm:$0xff]
        %v340 = vld [vmem:[%s1 + $0xd0] sm:$0xff]
        %v341 = vld [vmem:[%s1 + $0xd8] sm:$0xff]
        %v342 = vld [vmem:[%s1 + $0xe0] sm:$0xff]
        %v343 = vld [vmem:[%s1 + $0xe8] sm:$0xff]
        %v344 = vld [vmem:[%s1 + $0xf0] sm:$0xff]
        %v345 = vld [vmem:[%s1 + $0xf8] sm:$0xff]
        %v346 = vld [vmem:[%s1 + $0x100] sm:$0xff]
        %v347 = vld [vmem:[%s1 + $0x108] sm:$0xff]
        %v348 = vld [vmem:[%s1 + $0x110] sm:$0xff]
        %v349 = vld [vmem:[%s1 + $0x118] sm:$0xff]
        %v350 = vld [vmem:[%s1 + $0x120] sm:$0xff]
        %v351 = vld [vmem:[%s1 + $0x128] sm:$0xff]
        %v352 = vld [vmem:[%s1 + $0x130] sm:$0xff]
        %v353 = vld [vmem:[%s1 + $0x138] sm:$0xff]
        %v354 = vld [vmem:[%s1 + $0x140] sm:$0xff]
        %v355 = vld [vmem:[%s1 + $0x148] sm:$0xff]
        %v356 = vld [vmem:[%s1 + $0x150] sm:$0xff]
        %v357 = vld [vmem:[%s1 + $0x158] sm:$0xff]
        %v358 = vld [vmem:[%s1 + $0x160] sm:$0xff]
        %v359 = vld [vmem:[%s1 + $0x168] sm:$0xff]
        %v360 = vld [vmem:[%s1 + $0x170] sm:$0xff]
        %v361 = vld [vmem:[%s1 + $0x178] sm:$0xff]
        %v362 = vld [vmem:[%s1 + $0x180] sm:$0xff]
        %v363 = vld [vmem:[%s1 + $0x188] sm:$0xff]
        %v364 = vld [vmem:[%s1 + $0x190] sm:$0xff]
        %v365 = vld [vmem:[%s1 + $0x198] sm:$0xff]
        %v366 = vld [vmem:[%s1 + $0x1a0] sm:$0xff]
        %v367 = vld [vmem:[%s1 + $0x1a8] sm:$0xff]
        %v368 = vld [vmem:[%s1 + $0x1b0] sm:$0xff]
        %v369 = vld [vmem:[%s1 + $0x1b8] sm:$0xff]
        %v370 = vld [vmem:[%s1 + $0x1c0] sm:$0xff]
        %v371 = vld [vmem:[%s1 + $0x1c8] sm:$0xff]
        %v372 = vld [vmem:[%s1 + $0x1d0] sm:$0xff]
        %v373 = vld [vmem:[%s1 + $0x1d8] sm:$0xff]
        %v374 = vld [vmem:[%s1 + $0x1e0] sm:$0xff]
        %v375 = vld [vmem:[%s1 + $0x1e8] sm:$0xff]
        %v376 = vld [vmem:[%s1 + $0x1f0] sm:$0xff]
        %v377 = vld [vmem:[%s1 + $0x1f8] sm:$0xff]
        %v378 = vld [vmem:[%s1 + $0x200] sm:$0xff]
        %v379 = vld [vmem:[%s1 + $0x208] sm:$0xff]
        %v380 = vld [vmem:[%s1 + $0x210] sm:$0xff]
        %v381 = vld [vmem:[%s1 + $0x218] sm:$0xff]
        %v382 = vld [vmem:[%s1 + $0x220] sm:$0xff]
        %v383 = vld [vmem:[%s1 + $0x228] sm:$0xff]
        %v384 = vld [vmem:[%s1 + $0x230] sm:$0xff]
        %v385 = vld [vmem:[%s1 + $0x238] sm:$0xff]
        %v386 = vld [vmem:[%s1 + $0x240] sm:$0xff]
        %v387 = vld [vmem:[%s1 + $0x248] sm:$0xff]
        %v388 = vld [vmem:[%s1 + $0x250] sm:$0xff]
        %v389 = vld [vmem:[%s1 + $0x258] sm:$0xff]
        %v390 = vld [vmem:[%s1 + $0x260] sm:$0xff]
        %v391 = vld [vmem:[%s1 + $0x268] sm:$0xff]
        %v392 = vld [vmem:[%s1 + $0x270] sm:$0xff]
        %v393 = vld [vmem:[%s1 + $0x278] sm:$0xff]
        %v394 = vld [vmem:[%s1 + $0x280] sm:$0xff]
        %v395 = vld [vmem:[%s1 + $0x288] sm:$0xff]
        %v396 = vld [vmem:[%s1 + $0x290] sm:$0xff]
        %v397 = vld [vmem:[%s1 + $0x298] sm:$0xff]
        %v398 = vld [vmem:[%s1 + $0x2a0] sm:$0xff]
        %v399 = vld [vmem:[%s1 + $0x2a8] sm:$0xff]
        %v400 = vld [vmem:[%s1 + $0x2b0] sm:$0xff]
        %v401 = vld [vmem:[%s1 + $0x2b8] sm:$0xff]
        %v402 = vld [vmem:[%s1 + $0x2c0] sm:$0xff]
        %v403 = vld [vmem:[%s1 + $0x2c8] sm:$0xff]
        %v404 = vld [vmem:[%s1 + $0x2d0] sm:$0xff]
        %v405 = vld [vmem:[%s1 + $0x2d8] sm:$0xff]
        %v406 = vld [vmem:[%s1 + $0x2e0] sm:$0xff]
        %v407 = vld [vmem:[%s1 + $0x2e8] sm:$0xff]
        %v408 = vld [vmem:[%s1 + $0x2f0] sm:$0xff]
        %v409 = vld [vmem:[%s1 + $0x2f8] sm:$0xff]
        %v410 = vld [vmem:[%s1 + $0x300] sm:$0xff]
        %v411 = vld [vmem:[%s1 + $0x308] sm:$0xff]
        %v412 = vld [vmem:[%s1 + $0x310] sm:$0xff]
        %v413 = vld [vmem:[%s1 + $0x318] sm:$0xff]
        %v414 = vld [vmem:[%s1 + $0x320] sm:$0xff]
        %v415 = vld [vmem:[%s1 + $0x328] sm:$0xff]
        %v416 = vld [vmem:[%s1 + $0x330] sm:$0xff]
        %v417 = vld [vmem:[%s1 + $0x338] sm:$0xff]
        %v418 = vld [vmem:[%s1 + $0x340] sm:$0xff]
        %v419 = vld [vmem:[%s1 + $0x348] sm:$0xff]
        %v420 = vld [vmem:[%s1 + $0x350] sm:$0xff]
        %v421 = vld [vmem:[%s1 + $0x358] sm:$0xff]
        %v422 = vld [vmem:[%s1 + $0x360] sm:$0xff]
        %v423 = vld [vmem:[%s1 + $0x368] sm:$0xff]
        %v424 = vld [vmem:[%s1 + $0x370] sm:$0xff]
        %v425 = vld [vmem:[%s1 + $0x378] sm:$0xff]
        %v426 = vld [vmem:[%s1 + $0x380] sm:$0xff]
        %v427 = vld [vmem:[%s1 + $0x388] sm:$0xff]
        %v428 = vld [vmem:[%s1 + $0x390] sm:$0xff]
        %v429 = vld [vmem:[%s1 + $0x398] sm:$0xff]
        %v430 = vld [vmem:[%s1 + $0x3a0] sm:$0xff]
        %v431 = vld [vmem:[%s1 + $0x3a8] sm:$0xff]
        %v432 = vld [vmem:[%s1 + $0x3b0] sm:$0xff]
        %v433 = vld [vmem:[%s1 + $0x3b8] sm:$0xff]
        %v434 = vld [vmem:[%s1 + $0x3c0] sm:$0xff]
        %v435 = vld [vmem:[%s1 + $0x3c8] sm:$0xff]
        %v436 = vld [vmem:[%s1 + $0x3d0] sm:$0xff]
        %v437 = vld [vmem:[%s1 + $0x3d8] sm:$0xff]
        %v438 = vld [vmem:[%s1 + $0x3e0] sm:$0xff]
        %v439 = vld [vmem:[%s1 + $0x3e8] sm:$0xff]
        %v440 = vld [vmem:[%s1 + $0x3f0] sm:$0xff]
        %v441 = vld [vmem:[%s1 + $0x3f8] sm:$0xff]
        %v442 = vld [vmem:[%s2] sm:$0x1]
        %v444 = vlaneseq
        %v445 = vshrl.u32 %v444, 7
        %v446 = vsub.s32 0, %v445
        %v447 = vrot.slane %v442, %v446
        %v451 = vcombine.high %v312, %v312
        %v453 = vunpack.c.l.s4 1983009808
        %v454 = vunpack.c.0.s8 %v453
        %v455 = vlaneseq
        %v456 = vshrl.u32 %v455, 7
        %v457 = vsub.s32 %v454, %v456
        %v458 = vrot.slane %v312, %v457
        %v460 = vunpack.c.l.s4 1983009808
        %v461 = vunpack.c.0.s8 %v460
        %v462 = vlaneseq
        %v463 = vshrl.u32 %v462, 7
        %v464 = vsub.s32 %v461, %v463
        %v465 = vrot.slane %v451, %v464
        %v466 = vcombine.high %v458, %v458
        %v467 = vcombine.high %v465, %v465
        %v468 = vcombine.high %v313, %v313
        %v470 = vunpack.c.l.s4 1983009808
        %v471 = vunpack.c.0.s8 %v470
        %v472 = vlaneseq
        %v473 = vshrl.u32 %v472, 7
        %v474 = vsub.s32 %v471, %v473
        %v475 = vrot.slane %v313, %v474
        %v477 = vunpack.c.l.s4 1983009808
        %v478 = vunpack.c.0.s8 %v477
        %v479 = vlaneseq
        %v480 = vshrl.u32 %v479, 7
        %v481 = vsub.s32 %v478, %v480
        %v482 = vrot.slane %v468, %v481
        %v483 = vcombine.high %v475, %v475
        %v484 = vcombine.high %v482, %v482
        %493 = vmatprep.subr.mxu0 0.0
        %494 = vmatpush1.msra.mxu0 %v329
        %495 = vmatprep.subr.mxu0 0.0
        %496 = vmatpush1.msra.mxu0 %v328
        %497 = vmatprep.subr.mxu0 0.0
        %498 = vmatpush1.msra.mxu0 %v327
        %499 = vmatprep.subr.mxu0 0.0
        %500 = vmatpush1.msra.mxu0 %v326
        %501 = vmatprep.subr.mxu0 0.0
        %502 = vmatpush1.msra.mxu0 %v325
        %503 = vmatprep.subr.mxu0 0.0
        %504 = vmatpush1.msra.mxu0 %v324
        %505 = vmatprep.subr.mxu0 0.0
        %506 = vmatpush1.msra.mxu0 %v323
        %507 = vmatprep.subr.mxu0 0.0
        %508 = vmatpush1.msra.mxu0 %v322
        %509 = vmatprep.subr.mxu0 0.0
        %510 = vmatpush1.msra.mxu0 %v321
        %511 = vmatprep.subr.mxu0 0.0
        %512 = vmatpush1.msra.mxu0 %v320
        %513 = vmatprep.subr.mxu0 0.0
        %514 = vmatpush1.msra.mxu0 %v319
        %515 = vmatprep.subr.mxu0 0.0
        %516 = vmatpush1.msra.mxu0 %v318
        %517 = vmatprep.subr.mxu0 0.0
        %518 = vmatpush1.msra.mxu0 %v317
        %519 = vmatprep.subr.mxu0 0.0
        %520 = vmatpush1.msra.mxu0 %v316
        %521 = vmatprep.subr.mxu0 0.0
        %522 = vmatpush1.msra.mxu0 %v315
        %523 = vmatprep.subr.mxu0 0.0
        %524 = vmatpush1.msra.mxu0 %v314
        %525 = vmatprep.subr.mxu0 0.0
        %526 = vmatpush2.msra.mxu0 %v345
        %527 = vmatprep.subr.mxu0 0.0
        %528 = vmatpush2.msra.mxu0 %v344
        %529 = vmatprep.subr.mxu0 0.0
        %530 = vmatpush2.msra.mxu0 %v343
        %531 = vmatprep.subr.mxu0 0.0
        %532 = vmatpush2.msra.mxu0 %v342
        %533 = vmatprep.subr.mxu0 0.0
        %534 = vmatpush2.msra.mxu0 %v341
        %535 = vmatprep.subr.mxu0 0.0
        %536 = vmatpush2.msra.mxu0 %v340
        %537 = vmatprep.subr.mxu0 0.0
        %538 = vmatpush2.msra.mxu0 %v339
        %539 = vmatprep.subr.mxu0 0.0
        %540 = vmatpush2.msra.mxu0 %v338
        %541 = vmatprep.subr.mxu0 0.0
        %542 = vmatpush2.msra.mxu0 %v337
        %543 = vmatprep.subr.mxu0 0.0
        %544 = vmatpush2.msra.mxu0 %v336
        %545 = vmatprep.subr.mxu0 0.0
        %546 = vmatpush2.msra.mxu0 %v335
        %547 = vmatprep.subr.mxu0 0.0
        %548 = vmatpush2.msra.mxu0 %v334
        %549 = vmatprep.subr.mxu0 0.0
        %550 = vmatpush2.msra.mxu0 %v333
        %551 = vmatprep.subr.mxu0 0.0
        %552 = vmatpush2.msra.mxu0 %v332
        %553 = vmatprep.subr.mxu0 0.0
        %554 = vmatpush2.msra.mxu0 %v331
        %555 = vmatprep.subr.mxu0 0.0
        %556 = vmatpush2.msra.mxu0 %v330
        %557 = vmatprep.mubr.f32.mxu0 %v466
        %558 = vmatmul.mubr.f32.gmra.mxu0 %v458
        %v559 = vpop.f32.mrf.mxu0
        %v560 = vadd.f32 %v447, %v559
        %v561 = vpop.f32.mrf.mxu0
        %562 = vdwg.mxu0
        %563 = vmatprep.subr.mxu0 0.0
        %564 = vmatpush1.msra.mxu0 %v361
        %565 = vmatprep.subr.mxu0 0.0
        %566 = vmatpush1.msra.mxu0 %v360
        %567 = vmatprep.subr.mxu0 0.0
        %568 = vmatpush1.msra.mxu0 %v359
        %569 = vmatprep.subr.mxu0 0.0
        %570 = vmatpush1.msra.mxu0 %v358
        %571 = vmatprep.subr.mxu0 0.0
        %572 = vmatpush1.msra.mxu0 %v357
        %573 = vmatprep.subr.mxu0 0.0
        %574 = vmatpush1.msra.mxu0 %v356
        %575 = vmatprep.subr.mxu0 0.0
        %576 = vmatpush1.msra.mxu0 %v355
        %577 = vmatprep.subr.mxu0 0.0
        %578 = vmatpush1.msra.mxu0 %v354
        %579 = vmatprep.subr.mxu0 0.0
        %580 = vmatpush1.msra.mxu0 %v353
        %581 = vmatprep.subr.mxu0 0.0
        %582 = vmatpush1.msra.mxu0 %v352
        %583 = vmatprep.subr.mxu0 0.0
        %584 = vmatpush1.msra.mxu0 %v351
        %585 = vmatprep.subr.mxu0 0.0
        %586 = vmatpush1.msra.mxu0 %v350
        %587 = vmatprep.subr.mxu0 0.0
        %588 = vmatpush1.msra.mxu0 %v349
        %589 = vmatprep.subr.mxu0 0.0
        %590 = vmatpush1.msra.mxu0 %v348
        %591 = vmatprep.subr.mxu0 0.0
        %592 = vmatpush1.msra.mxu0 %v347
        %593 = vmatprep.subr.mxu0 0.0
        %594 = vmatpush1.msra.mxu0 %v346
        %595 = vmatprep.subr.mxu0 0.0
        %596 = vmatpush2.msra.mxu0 %v377
        %597 = vmatprep.subr.mxu0 0.0
        %598 = vmatpush2.msra.mxu0 %v376
        %599 = vmatprep.subr.mxu0 0.0
        %600 = vmatpush2.msra.mxu0 %v375
        %601 = vmatprep.subr.mxu0 0.0
        %602 = vmatpush2.msra.mxu0 %v374
        %603 = vmatprep.subr.mxu0 0.0
        %604 = vmatpush2.msra.mxu0 %v373
        %605 = vmatprep.subr.mxu0 0.0
        %606 = vmatpush2.msra.mxu0 %v372
        %607 = vmatprep.subr.mxu0 0.0
        %608 = vmatpush2.msra.mxu0 %v371
        %609 = vmatprep.subr.mxu0 0.0
        %610 = vmatpush2.msra.mxu0 %v370
        %611 = vmatprep.subr.mxu0 0.0
        %612 = vmatpush2.msra.mxu0 %v369
        %613 = vmatprep.subr.mxu0 0.0
        %614 = vmatpush2.msra.mxu0 %v368
        %615 = vmatprep.subr.mxu0 0.0
        %616 = vmatpush2.msra.mxu0 %v367
        %617 = vmatprep.subr.mxu0 0.0
        %618 = vmatpush2.msra.mxu0 %v366
        %619 = vmatprep.subr.mxu0 0.0
        %620 = vmatpush2.msra.mxu0 %v365
        %621 = vmatprep.subr.mxu0 0.0
        %622 = vmatpush2.msra.mxu0 %v364
        %623 = vmatprep.subr.mxu0 0.0
        %624 = vmatpush2.msra.mxu0 %v363
        %625 = vmatprep.subr.mxu0 0.0
        %626 = vmatpush2.msra.mxu0 %v362
        %627 = vmatprep.mubr.f32.mxu0 %v467
        %628 = vmatmul.mubr.f32.gmra.mxu0 %v465
        %v629 = vpop.f32.mrf.mxu0
        %v630 = vadd.f32 %v560, %v629
        %v631 = vpop.f32.mrf.mxu0
        %632 = vdwg.mxu0
        %633 = vmatprep.subr.mxu0 0.0
        %634 = vmatpush1.msra.mxu0 %v393
        %635 = vmatprep.subr.mxu0 0.0
        %636 = vmatpush1.msra.mxu0 %v392
        %637 = vmatprep.subr.mxu0 0.0
        %638 = vmatpush1.msra.mxu0 %v391
        %639 = vmatprep.subr.mxu0 0.0
        %640 = vmatpush1.msra.mxu0 %v390
        %641 = vmatprep.subr.mxu0 0.0
        %642 = vmatpush1.msra.mxu0 %v389
        %643 = vmatprep.subr.mxu0 0.0
        %644 = vmatpush1.msra.mxu0 %v388
        %645 = vmatprep.subr.mxu0 0.0
        %646 = vmatpush1.msra.mxu0 %v387
        %647 = vmatprep.subr.mxu0 0.0
        %648 = vmatpush1.msra.mxu0 %v386
        %649 = vmatprep.subr.mxu0 0.0
        %650 = vmatpush1.msra.mxu0 %v385
        %651 = vmatprep.subr.mxu0 0.0
        %652 = vmatpush1.msra.mxu0 %v384
        %653 = vmatprep.subr.mxu0 0.0
        %654 = vmatpush1.msra.mxu0 %v383
        %655 = vmatprep.subr.mxu0 0.0
        %656 = vmatpush1.msra.mxu0 %v382
        %657 = vmatprep.subr.mxu0 0.0
        %658 = vmatpush1.msra.mxu0 %v381
        %659 = vmatprep.subr.mxu0 0.0
        %660 = vmatpush1.msra.mxu0 %v380
        %661 = vmatprep.subr.mxu0 0.0
        %662 = vmatpush1.msra.mxu0 %v379
        %663 = vmatprep.subr.mxu0 0.0
        %664 = vmatpush1.msra.mxu0 %v378
        %665 = vmatprep.subr.mxu0 0.0
        %666 = vmatpush2.msra.mxu0 %v409
        %667 = vmatprep.subr.mxu0 0.0
        %668 = vmatpush2.msra.mxu0 %v408
        %669 = vmatprep.subr.mxu0 0.0
        %670 = vmatpush2.msra.mxu0 %v407
        %671 = vmatprep.subr.mxu0 0.0
        %672 = vmatpush2.msra.mxu0 %v406
        %673 = vmatprep.subr.mxu0 0.0
        %674 = vmatpush2.msra.mxu0 %v405
        %675 = vmatprep.subr.mxu0 0.0
        %676 = vmatpush2.msra.mxu0 %v404
        %677 = vmatprep.subr.mxu0 0.0
        %678 = vmatpush2.msra.mxu0 %v403
        %679 = vmatprep.subr.mxu0 0.0
        %680 = vmatpush2.msra.mxu0 %v402
        %681 = vmatprep.subr.mxu0 0.0
        %682 = vmatpush2.msra.mxu0 %v401
        %683 = vmatprep.subr.mxu0 0.0
        %684 = vmatpush2.msra.mxu0 %v400
        %685 = vmatprep.subr.mxu0 0.0
        %686 = vmatpush2.msra.mxu0 %v399
        %687 = vmatprep.subr.mxu0 0.0
        %688 = vmatpush2.msra.mxu0 %v398
        %689 = vmatprep.subr.mxu0 0.0
        %690 = vmatpush2.msra.mxu0 %v397
        %691 = vmatprep.subr.mxu0 0.0
        %692 = vmatpush2.msra.mxu0 %v396
        %693 = vmatprep.subr.mxu0 0.0
        %694 = vmatpush2.msra.mxu0 %v395
        %695 = vmatprep.subr.mxu0 0.0
        %696 = vmatpush2.msra.mxu0 %v394
        %697 = vmatprep.mubr.f32.mxu0 %v483
        %698 = vmatmul.mubr.f32.gmra.mxu0 %v475
        %v699 = vpop.f32.mrf.mxu0
        %v700 = vadd.f32 %v630, %v699
        %v701 = vpop.f32.mrf.mxu0
        %702 = vdwg.mxu0
        %703 = vmatprep.subr.mxu0 0.0
        %704 = vmatpush1.msra.mxu0 %v425
        %705 = vmatprep.subr.mxu0 0.0
        %706 = vmatpush1.msra.mxu0 %v424
        %707 = vmatprep.subr.mxu0 0.0
        %708 = vmatpush1.msra.mxu0 %v423
        %709 = vmatprep.subr.mxu0 0.0
        %710 = vmatpush1.msra.mxu0 %v422
        %711 = vmatprep.subr.mxu0 0.0
        %712 = vmatpush1.msra.mxu0 %v421
        %713 = vmatprep.subr.mxu0 0.0
        %714 = vmatpush1.msra.mxu0 %v420
        %715 = vmatprep.subr.mxu0 0.0
        %716 = vmatpush1.msra.mxu0 %v419
        %717 = vmatprep.subr.mxu0 0.0
        %718 = vmatpush1.msra.mxu0 %v418
        %719 = vmatprep.subr.mxu0 0.0
        %720 = vmatpush1.msra.mxu0 %v417
        %721 = vmatprep.subr.mxu0 0.0
        %722 = vmatpush1.msra.mxu0 %v416
        %723 = vmatprep.subr.mxu0 0.0
        %724 = vmatpush1.msra.mxu0 %v415
        %725 = vmatprep.subr.mxu0 0.0
        %726 = vmatpush1.msra.mxu0 %v414
        %727 = vmatprep.subr.mxu0 0.0
        %728 = vmatpush1.msra.mxu0 %v413
        %729 = vmatprep.subr.mxu0 0.0
        %730 = vmatpush1.msra.mxu0 %v412
        %731 = vmatprep.subr.mxu0 0.0
        %732 = vmatpush1.msra.mxu0 %v411
        %733 = vmatprep.subr.mxu0 0.0
        %734 = vmatpush1.msra.mxu0 %v410
        %735 = vmatprep.subr.mxu0 0.0
        %736 = vmatpush2.msra.mxu0 %v441
        %737 = vmatprep.subr.mxu0 0.0
        %738 = vmatpush2.msra.mxu0 %v440
        %739 = vmatprep.subr.mxu0 0.0
        %740 = vmatpush2.msra.mxu0 %v439
        %741 = vmatprep.subr.mxu0 0.0
        %742 = vmatpush2.msra.mxu0 %v438
        %743 = vmatprep.subr.mxu0 0.0
        %744 = vmatpush2.msra.mxu0 %v437
        %745 = vmatprep.subr.mxu0 0.0
        %746 = vmatpush2.msra.mxu0 %v436
        %747 = vmatprep.subr.mxu0 0.0
        %748 = vmatpush2.msra.mxu0 %v435
        %749 = vmatprep.subr.mxu0 0.0
        %750 = vmatpush2.msra.mxu0 %v434
        %751 = vmatprep.subr.mxu0 0.0
        %752 = vmatpush2.msra.mxu0 %v433
        %753 = vmatprep.subr.mxu0 0.0
        %754 = vmatpush2.msra.mxu0 %v432
        %755 = vmatprep.subr.mxu0 0.0
        %756 = vmatpush2.msra.mxu0 %v431
        %757 = vmatprep.subr.mxu0 0.0
        %758 = vmatpush2.msra.mxu0 %v430
        %759 = vmatprep.subr.mxu0 0.0
        %760 = vmatpush2.msra.mxu0 %v429
        %761 = vmatprep.subr.mxu0 0.0
        %762 = vmatpush2.msra.mxu0 %v428
        %763 = vmatprep.subr.mxu0 0.0
        %764 = vmatpush2.msra.mxu0 %v427
        %765 = vmatprep.subr.mxu0 0.0
        %766 = vmatpush2.msra.mxu0 %v426
        %767 = vmatprep.mubr.f32.mxu0 %v484
        %768 = vmatmul.mubr.f32.gmra.mxu0 %v482
        %v769 = vpop.f32.mrf.mxu0
        %v770 = vadd.f32 %v700, %v769
        %v771 = vpop.f32.mrf.mxu0
        %772 = vdwg.mxu0
        %v773 = vld [vmem:[%s266] sm:$0xff]
        %v774 = vld [vmem:[%s266 + $0x8] sm:$0xff]
        %v775 = vld [vmem:[%s266 + $0x10] sm:$0xff]
        %v776 = vld [vmem:[%s266 + $0x18] sm:$0xff]
        %v777 = vld [vmem:[%s266 + $0x20] sm:$0xff]
        %v778 = vld [vmem:[%s266 + $0x28] sm:$0xff]
        %v779 = vld [vmem:[%s266 + $0x30] sm:$0xff]
        %v780 = vld [vmem:[%s266 + $0x38] sm:$0xff]
        %v781 = vld [vmem:[%s309] sm:$0x3]
        %v783 = vlaneseq
        %v784 = vshrl.u32 %v783, 7
        %v785 = vsub.s32 0, %v784
        %v786 = vrot.slane %v781, %v785
        %v787 = vlaneseq
        %v788 = vshrl.u32 %v787, 7
        %v789 = vsub.s32 1, %v788
        %v790 = vrot.slane %v781, %v789
        %vm793 = vcmask 261120
        %v795 = vsel %vm793, %v770, 0
        %797 = vmatprep.subr.mxu0 0.0
        %798 = vmatpush1.msra.mxu0 0.0
        %799 = vmatprep.subr.mxu0 0.0
        %800 = vmatpush1.msra.mxu0 0.0
        %801 = vmatprep.subr.mxu0 0.0
        %802 = vmatpush1.msra.mxu0 0.0
        %803 = vmatprep.subr.mxu0 0.0
        %804 = vmatpush1.msra.mxu0 0.0
        %805 = vmatprep.subr.mxu0 0.0
        %806 = vmatpush1.msra.mxu0 0.0
        %807 = vmatprep.subr.mxu0 0.0
        %808 = vmatpush1.msra.mxu0 0.0
        %809 = vmatprep.subr.mxu0 0.0
        %810 = vmatpush1.msra.mxu0 0.0
        %811 = vmatprep.subr.mxu0 0.0
        %812 = vmatpush1.msra.mxu0 0.0
        %813 = vmatprep.subr.mxu0 0.0
        %814 = vmatpush1.msra.mxu0 0.0
        %815 = vmatprep.subr.mxu0 0.0
        %816 = vmatpush1.msra.mxu0 0.0
        %817 = vmatprep.subr.mxu0 0.0
        %818 = vmatpush1.msra.mxu0 0.0
        %819 = vmatprep.subr.mxu0 0.0
        %820 = vmatpush1.msra.mxu0 0.0
        %821 = vmatprep.subr.mxu0 %v780
        %822 = vmatpush1.msra.mxu0 %v779
        %823 = vmatprep.subr.mxu0 %v778
        %824 = vmatpush1.msra.mxu0 %v777
        %825 = vmatprep.subr.mxu0 %v776
        %826 = vmatpush1.msra.mxu0 %v775
        %827 = vmatprep.subr.mxu0 %v774
        %828 = vmatpush1.msra.mxu0 %v773
        %829 = vmatprep.subr.mxu0 0.0
        %830 = vmatpush2.msra.mxu0 0.0
        %831 = vmatprep.subr.mxu0 0.0
        %832 = vmatpush2.msra.mxu0 0.0
        %833 = vmatprep.subr.mxu0 0.0
        %834 = vmatpush2.msra.mxu0 0.0
        %835 = vmatprep.subr.mxu0 0.0
        %836 = vmatpush2.msra.mxu0 0.0
        %837 = vmatprep.subr.mxu0 0.0
        %838 = vmatpush2.msra.mxu0 0.0
        %839 = vmatprep.subr.mxu0 0.0
        %840 = vmatpush2.msra.mxu0 0.0
        %841 = vmatprep.subr.mxu0 0.0
        %842 = vmatpush2.msra.mxu0 0.0
        %843 = vmatprep.subr.mxu0 0.0
        %844 = vmatpush2.msra.mxu0 0.0
        %845 = vmatprep.subr.mxu0 0.0
        %846 = vmatpush2.msra.mxu0 0.0
        %847 = vmatprep.subr.mxu0 0.0
        %848 = vmatpush2.msra.mxu0 0.0
        %849 = vmatprep.subr.mxu0 0.0
        %850 = vmatpush2.msra.mxu0 0.0
        %851 = vmatprep.subr.mxu0 0.0
        %852 = vmatpush2.msra.mxu0 0.0
        %853 = vmatprep.subr.mxu0 0.0
        %854 = vmatpush2.msra.mxu0 0.0
        %855 = vmatprep.subr.mxu0 0.0
        %856 = vmatpush2.msra.mxu0 0.0
        %857 = vmatprep.subr.mxu0 0.0
        %858 = vmatpush2.msra.mxu0 0.0
        %859 = vmatprep.subr.mxu0 0.0
        %860 = vmatpush2.msra.mxu0 0.0
        %861 = vmatprep.mubr.f32.mxu0 0.0
        %862 = vmatmul.mubr.f32.gmra.mxu0 %v795
        %v863 = vpop.f32.mrf.mxu0
        %v864 = vadd.f32 %v786, %v863
        %v865 = vpop.f32.mrf.mxu0
        %v866 = vadd.f32 %v790, %v865
        %867 = vdwg.mxu0
        %v870 = vcombine.low %v864, %v866
        %v872 = vunpack.c.l.s4 1983009808
        %v873 = vunpack.c.0.s8 %v872
        %v874 = vlaneseq
        %v875 = vshrl.u32 %v874, 7
        %v876 = vsub.s32 %v873, %v875
        %v877 = vrot.slane %v870, %v876
        %879 = vst [vmem:[%s299] sm:$0xf] %v877
        %s880 = sand.u32 %s161, 1
        %s881 = scalar_lea.sflag [#allocation4], %s880
        %s882 = sand.u32 %s161, 1
        %s883 = smul.addr %s882, 4
        %s884 = scalar_lea.vmem [#allocation3], %s883
        // Predicated region
        $region64: #{tpu_custom_call.1} parent=58 // pred_check
          %p885 = pneg %p171
        $region65: #{tpu_custom_call.1} parent=58 // pred_check_branch
          %887 = sbr.rel (%p885) target = $region67
        $region66: #{tpu_custom_call.1} parent=58 // pred_region
          %s888 = smul.u32 2, %s24
          %s890 = ssub.s32 64, 64
          %891 = vsyncadd %s881, %s890
          %s892 = smul.addr %s23, 8
          %s893 = sadd.s32 %s888, %s892
          %s894 = smul.addr %s893, 32
          %s895 = scalar_lea.hbm %s5, %s894
          %s897 = sshll.u32 %s884, 4
          %s898 = int_to_ptr.vmem [resolvable:$true] %s897
          %900 = dma.vmem_to_hbm [thread:$0]  %s898, 64, %s895, %s881
        $region67: #{tpu_custom_call.1} parent=58 // pred_fallthru
          _
      $region59: #{tpu_custom_call.1} parent=5 // pred_fallthru
        _
      %p901 = scmp.le.s32.totalorder 2, %s14
      // Predicated region
      $region68: #{tpu_custom_call.1} parent=5 // pred_check
        %p902 = pneg %p901
      $region69: #{tpu_custom_call.1} parent=5 // pred_check_branch
        %904 = sbr.rel (%p902) target = $region71
      $region70: #{tpu_custom_call.1} parent=5 // pred_region
        %s905 = ssub.s32 %s14, 2
        // Predicated region
        $region72: #{tpu_custom_call.1} parent=70 // pred_check
          %p906 = pneg %p177
        $region73: #{tpu_custom_call.1} parent=70 // pred_check_branch
          %908 = sbr.rel (%p906) target = $region75
        $region74: #{tpu_custom_call.1} parent=70 // pred_region
          %s909 = sand.u32 %s162, 1
          %s910 = scalar_lea.sflag [#allocation4], %s909
          %s911 = sand.u32 %s162, 1
          %s912 = smul.addr %s911, 4
          %s913 = scalar_lea.vmem [#allocation3], %s912
          %914 = dma.done %s910, 64
        $region75: #{tpu_custom_call.1} parent=70 // pred_fallthru
          _
      $region71: #{tpu_custom_call.1} parent=5 // pred_fallthru
        _
    $region6: #{tpu_custom_call.1} parent=1 // loop_footer
      %s18 = sadd.s32 1, %s14
    $region7: #{tpu_custom_call.1} parent=1 // loop_footer_branch
      %13 = sbr.rel target = $region3
    $region8: #{tpu_custom_call.1} parent=1 // loop_exit
      _
    %915 = vsyncpa [#allocation4], 1
    %s916 = scalar_lea.sflag [#allocation4], 1
    %917 = vsyncpa %s916, 1

// kernel: tpu_custom_call.1
$region0: #{tpu_custom_call.1}
  #allocation0 [shape = 'u32[]', space=smem, size = 0x4, offset = 0x4, fixed_abs, tag = 'smem constant byte address 0x4 - core index']
  #allocation1 [shape = 'u32[144,128]{1,0:T(1,128)}', space=vmem, size = 0x12000, scoped, tag = 'internal scratch']
  %s0 = inlined_call_operand.vmem [shape: f32[2,1024], index: 0, kind: input, shape index: {}]
  %s1 = inlined_call_operand.vmem [shape: f32[1024,32], index: 1, kind: input, shape index: {}]
  %s2 = inlined_call_operand.vmem [shape: f32[1,32], index: 2, kind: input, shape index: {}]
  %s3 = inlined_call_operand.vmem [shape: f32[32,1024], index: 3, kind: input, shape index: {}]
  %s4 = inlined_call_operand.vmem [shape: f32[1,1024], index: 4, kind: input, shape index: {}]
  %s5 = inlined_call_operand.hbm [shape: f32[2,1024], index: 5, kind: output, shape index: {}]
  %s6 = sld [smem:[#allocation0]]
  $region76: #{tpu_custom_call.1} parent=0
    _
  %s8 = ssub.s32 1, %s6
  %s9 = scalar_select 0, %s8, %s6
  $region1: #{tpu_custom_call.1} parent=0
    #allocation2 [shape = 'u8[65536]{0}', space=vmem, size = 0x10000, scoped, tag = 'input window, operand 3']
    #allocation3 [shape = 'u8[4096]{0}', space=vmem, size = 0x1000, scoped, tag = 'output window, operand 0']
    #allocation4 [shape = 's32[2]{0}', space=sflag, size = 0x8, scoped, tag = 'scoped memory for tpu_custom_call.1']
    %10 = vsyncpa [#allocation4], 0
    %s11 = scalar_lea.sflag [#allocation4], 1
    %12 = vsyncpa %s11, 0
    loop: start=0, step=1, limit=6
    $region2: #{tpu_custom_call.1} parent=1 // loop_pre_header
      _
    $region3: #{tpu_custom_call.1} parent=1 // loop_header
      %s14 = sphi 0, %s18
      %p15 = scmp.ge.s32.totalorder %s14, 6
      %s21 = sphi 0, %s33
      %s22 = sphi 0, %s29
      %s23 = sphi 0, %s21
      %s24 = sphi 0, %s22
      %s25 = sphi 0, %s23
      %s26 = sphi 0, %s24
      %s36 = sphi 0, %s38
      %s39 = sphi 0, %s36
      %s40 = sphi 0, %s39
      %s56 = sphi 0, %s40
      %s60 = sphi 0, %s60
      %s62 = sphi 0, %s60
      %s63 = sphi 0, %s62
      %s77 = sphi 0, %s63
      %s81 = sphi 0, %s81
      %s83 = sphi 0, %s81
      %s84 = sphi 0, %s83
      %s98 = sphi 0, %s84
      %s104 = sphi 0, %s106
      %s107 = sphi 0, %s104
      %s108 = sphi 0, %s107
      %s124 = sphi 0, %s108
      %s130 = sphi 0, %s132
      %s133 = sphi 0, %s130
      %s134 = sphi 0, %s133
      %s150 = sphi 0, %s134
      %s158 = sphi 0, %s160
      %s161 = sphi 0, %s158
      %s162 = sphi 0, %s161
      %s178 = sphi 0, %s162
    $region4: #{tpu_custom_call.1} parent=1 // loop_header_branch
      %17 = sbr.rel (%p15) target = $region8
    $region5: #{tpu_custom_call.1} parent=1 // loop_body
      %s19 = ssub.s32 %s14, 1
      %s20 = ssub.s32 %s14, 2
      %s27 = sadd.s32 1, %s22
      %p28 = scmp.ge.s32.totalorder %s27, 4
      %s29 = scalar_select %p28, 0, %s27
      %s30 = sadd.s32 1, %s21
      %s31 = scalar_select %p28, %s30, %s21
      %p32 = scmp.ge.s32.totalorder %s31, 1
      %s33 = scalar_select %p32, 0, %s31
      %s34 = ssub.s32 %s21, %s33
      %p35 = scmp.eq.s32.totalorder %s34, 0
      %s37 = sadd.s32 %s36, 1
      %s38 = scalar_select %p35, %s36, %s37
      %p41 = pneg %p35
      %p42 = scmp.eq.s32.totalorder %s14, 3
      %p43 = por %p41, %p42
      %p44 = scmp.ne.s32.totalorder %s36, %s39
      %p45 = scmp.eq.s32.totalorder %s14, 0
      %p46 = por %p44, %p45
      %p47 = scmp.ne.s32.totalorder %s36, %s39
      %p48 = scmp.eq.s32.totalorder %s19, 3
      %p49 = por %p47, %p48
      %p50 = scmp.ne.s32.totalorder %s39, %s40
      %p51 = scmp.eq.s32.totalorder %s19, 0
      %p52 = por %p50, %p51
      %p53 = scmp.ne.s32.totalorder %s39, %s40
      %p54 = scmp.eq.s32.totalorder %s20, 3
      %p55 = por %p53, %p54
      %p57 = scmp.ne.s32.totalorder %s40, %s56
      %p58 = scmp.eq.s32.totalorder %s20, 0
      %p59 = por %p57, %p58
      %s61 = sadd.s32 %s60, 1
      %p64 = scmp.eq.s32.totalorder %s14, 3
      %p65 = scmp.ne.s32.totalorder %s60, %s62
      %p66 = scmp.eq.s32.totalorder %s14, 0
      %p67 = por %p65, %p66
      %p68 = scmp.ne.s32.totalorder %s60, %s62
      %p69 = scmp.eq.s32.totalorder %s19, 3
      %p70 = por %p68, %p69
      %p71 = scmp.ne.s32.totalorder %s62, %s63
      %p72 = scmp.eq.s32.totalorder %s19, 0
      %p73 = por %p71, %p72
      %p74 = scmp.ne.s32.totalorder %s62, %s63
      %p75 = scmp.eq.s32.totalorder %s20, 3
      %p76 = por %p74, %p75
      %p78 = scmp.ne.s32.totalorder %s63, %s77
      %p79 = scmp.eq.s32.totalorder %s20, 0
      %p80 = por %p78, %p79
      %s82 = sadd.s32 %s81, 1
      %p85 = scmp.eq.s32.totalorder %s14, 3
      %p86 = scmp.ne.s32.totalorder %s81, %s83
      %p87 = scmp.eq.s32.totalorder %s14, 0
      %p88 = por %p86, %p87
      %p89 = scmp.ne.s32.totalorder %s81, %s83
      %p90 = scmp.eq.s32.totalorder %s19, 3
      %p91 = por %p89, %p90
      %p92 = scmp.ne.s32.totalorder %s83, %s84
      %p93 = scmp.eq.s32.totalorder %s19, 0
      %p94 = por %p92, %p93
      %p95 = scmp.ne.s32.totalorder %s83, %s84
      %p96 = scmp.eq.s32.totalorder %s20, 3
      %p97 = por %p95, %p96
      %p99 = scmp.ne.s32.totalorder %s84, %s98
      %p100 = scmp.eq.s32.totalorder %s20, 0
      %p101 = por %p99, %p100
      %s102 = ssub.s32 %s22, %s29
      %p103 = scmp.eq.s32.totalorder %s102, 0
      %s105 = sadd.s32 %s104, 1
      %s106 = scalar_select %p103, %s104, %s105
      %p109 = pneg %p103
      %p110 = scmp.eq.s32.totalorder %s14, 3
      %p111 = por %p109, %p110
      %p112 = scmp.ne.s32.totalorder %s104, %s107
      %p113 = scmp.eq.s32.totalorder %s14, 0
      %p114 = por %p112, %p113
      %p115 = scmp.ne.s32.totalorder %s104, %s107
      %p116 = scmp.eq.s32.totalorder %s19, 3
      %p117 = por %p115, %p116
      %p118 = scmp.ne.s32.totalorder %s107, %s108
      %p119 = scmp.eq.s32.totalorder %s19, 0
      %p120 = por %p118, %p119
      %p121 = scmp.ne.s32.totalorder %s107, %s108
      %p122 = scmp.eq.s32.totalorder %s20, 3
      %p123 = por %p121, %p122
      %p125 = scmp.ne.s32.totalorder %s108, %s124
      %p126 = scmp.eq.s32.totalorder %s20, 0
      %p127 = por %p125, %p126
      %s128 = ssub.s32 %s22, %s29
      %p129 = scmp.eq.s32.totalorder %s128, 0
      %s131 = sadd.s32 %s130, 1
      %s132 = scalar_select %p129, %s130, %s131
      %p135 = pneg %p129
      %p136 = scmp.eq.s32.totalorder %s14, 3
      %p137 = por %p135, %p136
      %p138 = scmp.ne.s32.totalorder %s130, %s133
      %p139 = scmp.eq.s32.totalorder %s14, 0
      %p140 = por %p138, %p139
      %p141 = scmp.ne.s32.totalorder %s130, %s133
      %p142 = scmp.eq.s32.totalorder %s19, 3
      %p143 = por %p141, %p142
      %p144 = scmp.ne.s32.totalorder %s133, %s134
      %p145 = scmp.eq.s32.totalorder %s19, 0
      %p146 = por %p144, %p145
      %p147 = scmp.ne.s32.totalorder %s133, %s134
      %p148 = scmp.eq.s32.totalorder %s20, 3
      %p149 = por %p147, %p148
      %p151 = scmp.ne.s32.totalorder %s134, %s150
      %p152 = scmp.eq.s32.totalorder %s20, 0
      %p153 = por %p151, %p152
      %s154 = ssub.s32 %s21, %s33
      %s155 = ssub.s32 %s22, %s29
      %s156 = sor.u32 %s154, %s155
      %p157 = scmp.eq.s32.totalorder %s156, 0
      %s159 = sadd.s32 %s158, 1
      %s160 = scalar_select %p157, %s158, %s159
      %p163 = pneg %p157
      %p164 = scmp.eq.s32.totalorder %s14, 3
      %p165 = por %p163, %p164
      %p166 = scmp.ne.s32.totalorder %s158, %s161
      %p167 = scmp.eq.s32.totalorder %s14, 0
      %p168 = por %p166, %p167
      %p169 = scmp.ne.s32.totalorder %s158, %s161
      %p170 = scmp.eq.s32.totalorder %s19, 3
      %p171 = por %p169, %p170
      %p172 = scmp.ne.s32.totalorder %s161, %s162
      %p173 = scmp.eq.s32.totalorder %s19, 0
      %p174 = por %p172, %p173
      %p175 = scmp.ne.s32.totalorder %s161, %s162
      %p176 = scmp.eq.s32.totalorder %s20, 3
      %p177 = por %p175, %p176
      %p179 = scmp.ne.s32.totalorder %s162, %s178
      %p180 = scmp.eq.s32.totalorder %s20, 0
      %p181 = por %p179, %p180
      %p182 = scmp.le.s32.totalorder 1, %s14
      %p183 = scmp.lt.s32.totalorder %s14, 5
      %p184 = pnand %p182, %p183
      %p185 = pneg %p184
      // Predicated region
      $region9: #{tpu_custom_call.1} parent=5 // pred_check
        _
      $region10: #{tpu_custom_call.1} parent=5 // pred_check_branch
        %187 = sbr.rel (%p184) target = $region12
      $region11: #{tpu_custom_call.1} parent=5 // pred_region
        %s188 = ssub.s32 %s14, 1
        // Predicated region
        $region13: #{tpu_custom_call.1} parent=11 // pred_check
          %p189 = pneg %p52
        $region14: #{tpu_custom_call.1} parent=11 // pred_check_branch
          %191 = sbr.rel (%p189) target = $region16
        $region15: #{tpu_custom_call.1} parent=11 // pred_region
          %p192 = scmp.lt.s32.totalorder %s23, 0
          %s193 = scalar_select %p192, %s23, 0
          %s194 = smul.addr %s193, 8
          %s195 = smul.addr %s194, 2
          %s196 = scalar_lea.vmem %s0, %s195
        $region16: #{tpu_custom_call.1} parent=11 // pred_fallthru
          _
        // Predicated region
        $region17: #{tpu_custom_call.1} parent=11 // pred_check
          %p197 = pneg %p73
        $region18: #{tpu_custom_call.1} parent=11 // pred_check_branch
          %199 = sbr.rel (%p197) target = $region20
        $region19: #{tpu_custom_call.1} parent=11 // pred_region
          _
        $region20: #{tpu_custom_call.1} parent=11 // pred_fallthru
          _
        // Predicated region
        $region21: #{tpu_custom_call.1} parent=11 // pred_check
          %p200 = pneg %p94
        $region22: #{tpu_custom_call.1} parent=11 // pred_check_branch
          %202 = sbr.rel (%p200) target = $region24
        $region23: #{tpu_custom_call.1} parent=11 // pred_region
          _
        $region24: #{tpu_custom_call.1} parent=11 // pred_fallthru
          _
      $region12: #{tpu_custom_call.1} parent=5 // pred_fallthru
        _
      %p203 = scmp.lt.s32.totalorder %s14, 4
      // Predicated region
      $region25: #{tpu_custom_call.1} parent=5 // pred_check
        %p204 = pneg %p203
      $region26: #{tpu_custom_call.1} parent=5 // pred_check_branch
        %206 = sbr.rel (%p204) target = $region28
      $region27: #{tpu_custom_call.1} parent=5 // pred_region
        // Predicated region
        $region29: #{tpu_custom_call.1} parent=27 // pred_check
          %p207 = pneg %p114
        $region30: #{tpu_custom_call.1} parent=27 // pred_check_branch
          %209 = sbr.rel (%p207) target = $region32
        $region31: #{tpu_custom_call.1} parent=27 // pred_region
          %s210 = sand.u32 %s104, 1
          %s211 = sand.u32 %s104, 1
          %s212 = smul.addr %s211, 64
          %s213 = scalar_lea.vmem [#allocation2], %s212
          %s214 = smul.u32 2, %s22
          %s215 = smul.addr %s214, 8
          %s216 = scalar_lea.vmem %s3, %s215
          // Predicated region
          $region33: #{tpu_custom_call.1} parent=31 // pred_check
            _
          $region34: #{tpu_custom_call.1} parent=31 // pred_check_branch
            %218 = sbr.rel (0) target = $region36
          $region35: #{tpu_custom_call.1} parent=31 // pred_region
            // Predicated region
            $region37: #{tpu_custom_call.1} parent=35 // pred_check
              _
            $region38: #{tpu_custom_call.1} parent=35 // pred_check_branch
              %220 = sbr.rel (0) target = $region40
            $region39: #{tpu_custom_call.1} parent=35 // pred_region
              loop: start=0, step=1, limit=1
              $region41: #{tpu_custom_call.1} parent=39 // loop_pre_header
                _
              $region42: #{tpu_custom_call.1} parent=39 // loop_header
                %s222 = sphi 0, %s226
                %p223 = scmp.ge.s32.totalorder %s222, 1
                %s227 = sphi %s216, %s216
                %s228 = sphi %s213, %s213
              $region43: #{tpu_custom_call.1} parent=39 // loop_header_branch
                %225 = sbr.rel (%p223) target = $region47
              $region44: #{tpu_custom_call.1} parent=39 // loop_body
                %v229 = vld [vmem:[%s227] sm:$0xff]
                %230 = vst [vmem:[%s228] sm:$0xff] %v229
                %v231 = vld [vmem:[%s227 + $0x8] sm:$0xff]
                %232 = vst [vmem:[%s228 + $0x8] sm:$0xff] %v231
                %v233 = vld [vmem:[%s227 + $0x40] sm:$0xff]
                %234 = vst [vmem:[%s228 + $0x10] sm:$0xff] %v233
                %v235 = vld [vmem:[%s227 + $0x48] sm:$0xff]
                %236 = vst [vmem:[%s228 + $0x18] sm:$0xff] %v235
                %v237 = vld [vmem:[%s227 + $0x80] sm:$0xff]
                %238 = vst [vmem:[%s228 + $0x20] sm:$0xff] %v237
                %v239 = vld [vmem:[%s227 + $0x88] sm:$0xff]
                %240 = vst [vmem:[%s228 + $0x28] sm:$0xff] %v239
                %v241 = vld [vmem:[%s227 + $0xc0] sm:$0xff]
                %242 = vst [vmem:[%s228 + $0x30] sm:$0xff] %v241
                %v243 = vld [vmem:[%s227 + $0xc8] sm:$0xff]
                %244 = vst [vmem:[%s228 + $0x38] sm:$0xff] %v243
              $region45: #{tpu_custom_call.1} parent=39 // loop_footer
                %s226 = sadd.s32 1, %s222
              $region46: #{tpu_custom_call.1} parent=39 // loop_footer_branch
                %221 = sbr.rel target = $region42
              $region47: #{tpu_custom_call.1} parent=39 // loop_exit
                _
            $region40: #{tpu_custom_call.1} parent=35 // pred_fallthru
              _
            // Predicated region
            $region48: #{tpu_custom_call.1} parent=35 // pred_check
              _
            $region49: #{tpu_custom_call.1} parent=35 // pred_check_branch
              %246 = sbr.rel target = $region51
            $region50: #{tpu_custom_call.1} parent=35 // pred_region
              _
            $region51: #{tpu_custom_call.1} parent=35 // pred_fallthru
              _
          $region36: #{tpu_custom_call.1} parent=31 // pred_fallthru
            _
          %247 = vnop
        $region32: #{tpu_custom_call.1} parent=27 // pred_fallthru
          _
        // Predicated region
        $region52: #{tpu_custom_call.1} parent=27 // pred_check
          %p248 = pneg %p140
        $region53: #{tpu_custom_call.1} parent=27 // pred_check_branch
          %250 = sbr.rel (%p248) target = $region55
        $region54: #{tpu_custom_call.1} parent=27 // pred_region
          %s251 = smul.u32 2, %s22
          %p252 = scmp.lt.s32.totalorder %s251, 7
          %s253 = scalar_select %p252, %s251, 7
          %s254 = scalar_lea.vmem %s4, %s253
          %s255 = smul.u32 2, %s22
        $region55: #{tpu_custom_call.1} parent=27 // pred_fallthru
          _
      $region28: #{tpu_custom_call.1} parent=5 // pred_fallthru
        _
      %p256 = scmp.le.s32.totalorder 1, %s14
      %p257 = scmp.lt.s32.totalorder %s14, 5
      %p258 = pnand %p256, %p257
      %p259 = pneg %p258
      // Predicated region
      $region56: #{tpu_custom_call.1} parent=5 // pred_check
        _
      $region57: #{tpu_custom_call.1} parent=5 // pred_check_branch
        %261 = sbr.rel (%p258) target = $region59
      $region58: #{tpu_custom_call.1} parent=5 // pred_region
        %s262 = ssub.s32 %s14, 1
        %s263 = sand.u32 %s107, 1
        %s264 = sand.u32 %s107, 1
        %s265 = smul.addr %s264, 64
        %s266 = scalar_lea.vmem [#allocation2], %s265
        // Predicated region
        $region60: #{tpu_custom_call.1} parent=58 // pred_check
          %p267 = pneg %p120
        $region61: #{tpu_custom_call.1} parent=58 // pred_check_branch
          %269 = sbr.rel (%p267) target = $region63
        $region62: #{tpu_custom_call.1} parent=58 // pred_region
          _
        $region63: #{tpu_custom_call.1} parent=58 // pred_fallthru
          _
        %p270 = scmp.lt.s32.totalorder %s23, 0
        %s271 = scalar_select %p270, %s23, 0
        %s272 = smul.addr %s271, 8
        %s273 = smul.addr %s272, 2
        %s274 = scalar_lea.vmem %s0, %s273
        %p275 = pneg %p52
        %p276 = pneg %p49
        %p277 = pneg %p73
        %p278 = pneg %p70
        %p279 = pneg %p94
        %p280 = pneg %p91
        %s281 = sand.u32 %s107, 1
        %s282 = sand.u32 %s107, 1
        %s283 = smul.addr %s282, 64
        %s284 = scalar_lea.vmem [#allocation2], %s283
        %p285 = pneg %p120
        %p286 = pneg %p117
        %s287 = smul.u32 2, %s24
        %p288 = scmp.lt.s32.totalorder %s287, 7
        %s289 = scalar_select %p288, %s287, 7
        %s290 = scalar_lea.vmem %s4, %s289
        %p291 = pneg %p146
        %p292 = pneg %p143
        %p293 = pneg %p174
        %p294 = pneg %p171
        %s295 = sand.u32 %s161, 1
        %s296 = scalar_lea.sflag [#allocation4], %s295
        %s297 = sand.u32 %s161, 1
        %s298 = smul.addr %s297, 4
        %s299 = scalar_lea.vmem [#allocation3], %s298
        %p300 = scmp.lt.s32.totalorder %s23, 0
        %s301 = scalar_select %p300, %s23, 0
        %s302 = smul.addr %s301, 8
        %s303 = smul.addr %s302, 2
        %s304 = scalar_lea.vmem %s0, %s303
        %s305 = smul.u32 2, %s24
        %s306 = smul.u32 2, %s24
        %p307 = scmp.lt.s32.totalorder %s306, 7
        %s308 = scalar_select %p307, %s306, 7
        %s309 = scalar_lea.vmem %s4, %s308
        %s310 = smul.u32 2, %s24
        %s311 = smul.u32 2, %s24
        %v312 = vld [vmem:[%s304] sm:$0xff]
        %v313 = vld [vmem:[%s304 + $0x8] sm:$0xff]
        %v314 = vld [vmem:[%s1] sm:$0xff]
        %v315 = vld [vmem:[%s1 + $0x8] sm:$0xff]
        %v316 = vld [vmem:[%s1 + $0x10] sm:$0xff]
        %v317 = vld [vmem:[%s1 + $0x18] sm:$0xff]
        %v318 = vld [vmem:[%s1 + $0x20] sm:$0xff]
        %v319 = vld [vmem:[%s1 + $0x28] sm:$0xff]
        %v320 = vld [vmem:[%s1 + $0x30] sm:$0xff]
        %v321 = vld [vmem:[%s1 + $0x38] sm:$0xff]
        %v322 = vld [vmem:[%s1 + $0x40] sm:$0xff]
        %v323 = vld [vmem:[%s1 + $0x48] sm:$0xff]
        %v324 = vld [vmem:[%s1 + $0x50] sm:$0xff]
        %v325 = vld [vmem:[%s1 + $0x58] sm:$0xff]
        %v326 = vld [vmem:[%s1 + $0x60] sm:$0xff]
        %v327 = vld [vmem:[%s1 + $0x68] sm:$0xff]
        %v328 = vld [vmem:[%s1 + $0x70] sm:$0xff]
        %v329 = vld [vmem:[%s1 + $0x78] sm:$0xff]
        %v330 = vld [vmem:[%s1 + $0x80] sm:$0xff]
        %v331 = vld [vmem:[%s1 + $0x88] sm:$0xff]
        %v332 = vld [vmem:[%s1 + $0x90] sm:$0xff]
        %v333 = vld [vmem:[%s1 + $0x98] sm:$0xff]
        %v334 = vld [vmem:[%s1 + $0xa0] sm:$0xff]
        %v335 = vld [vmem:[%s1 + $0xa8] sm:$0xff]
        %v336 = vld [vmem:[%s1 + $0xb0] sm:$0xff]
        %v337 = vld [vmem:[%s1 + $0xb8] sm:$0xff]
        %v338 = vld [vmem:[%s1 + $0xc0] sm:$0xff]
        %v339 = vld [vmem:[%s1 + $0xc8] sm:$0xff]
        %v340 = vld [vmem:[%s1 + $0xd0] sm:$0xff]
        %v341 = vld [vmem:[%s1 + $0xd8] sm:$0xff]
        %v342 = vld [vmem:[%s1 + $0xe0] sm:$0xff]
        %v343 = vld [vmem:[%s1 + $0xe8] sm:$0xff]
        %v344 = vld [vmem:[%s1 + $0xf0] sm:$0xff]
        %v345 = vld [vmem:[%s1 + $0xf8] sm:$0xff]
        %v346 = vld [vmem:[%s1 + $0x100] sm:$0xff]
        %v347 = vld [vmem:[%s1 + $0x108] sm:$0xff]
        %v348 = vld [vmem:[%s1 + $0x110] sm:$0xff]
        %v349 = vld [vmem:[%s1 + $0x118] sm:$0xff]
        %v350 = vld [vmem:[%s1 + $0x120] sm:$0xff]
        %v351 = vld [vmem:[%s1 + $0x128] sm:$0xff]
        %v352 = vld [vmem:[%s1 + $0x130] sm:$0xff]
        %v353 = vld [vmem:[%s1 + $0x138] sm:$0xff]
        %v354 = vld [vmem:[%s1 + $0x140] sm:$0xff]
        %v355 = vld [vmem:[%s1 + $0x148] sm:$0xff]
        %v356 = vld [vmem:[%s1 + $0x150] sm:$0xff]
        %v357 = vld [vmem:[%s1 + $0x158] sm:$0xff]
        %v358 = vld [vmem:[%s1 + $0x160] sm:$0xff]
        %v359 = vld [vmem:[%s1 + $0x168] sm:$0xff]
        %v360 = vld [vmem:[%s1 + $0x170] sm:$0xff]
        %v361 = vld [vmem:[%s1 + $0x178] sm:$0xff]
        %v362 = vld [vmem:[%s1 + $0x180] sm:$0xff]
        %v363 = vld [vmem:[%s1 + $0x188] sm:$0xff]
        %v364 = vld [vmem:[%s1 + $0x190] sm:$0xff]
        %v365 = vld [vmem:[%s1 + $0x198] sm:$0xff]
        %v366 = vld [vmem:[%s1 + $0x1a0] sm:$0xff]
        %v367 = vld [vmem:[%s1 + $0x1a8] sm:$0xff]
        %v368 = vld [vmem:[%s1 + $0x1b0] sm:$0xff]
        %v369 = vld [vmem:[%s1 + $0x1b8] sm:$0xff]
        %v370 = vld [vmem:[%s1 + $0x1c0] sm:$0xff]
        %v371 = vld [vmem:[%s1 + $0x1c8] sm:$0xff]
        %v372 = vld [vmem:[%s1 + $0x1d0] sm:$0xff]
        %v373 = vld [vmem:[%s1 + $0x1d8] sm:$0xff]
        %v374 = vld [vmem:[%s1 + $0x1e0] sm:$0xff]
        %v375 = vld [vmem:[%s1 + $0x1e8] sm:$0xff]
        %v376 = vld [vmem:[%s1 + $0x1f0] sm:$0xff]
        %v377 = vld [vmem:[%s1 + $0x1f8] sm:$0xff]
        %v378 = vld [vmem:[%s1 + $0x200] sm:$0xff]
        %v379 = vld [vmem:[%s1 + $0x208] sm:$0xff]
        %v380 = vld [vmem:[%s1 + $0x210] sm:$0xff]
        %v381 = vld [vmem:[%s1 + $0x218] sm:$0xff]
        %v382 = vld [vmem:[%s1 + $0x220] sm:$0xff]
        %v383 = vld [vmem:[%s1 + $0x228] sm:$0xff]
        %v384 = vld [vmem:[%s1 + $0x230] sm:$0xff]
        %v385 = vld [vmem:[%s1 + $0x238] sm:$0xff]
        %v386 = vld [vmem:[%s1 + $0x240] sm:$0xff]
        %v387 = vld [vmem:[%s1 + $0x248] sm:$0xff]
        %v388 = vld [vmem:[%s1 + $0x250] sm:$0xff]
        %v389 = vld [vmem:[%s1 + $0x258] sm:$0xff]
        %v390 = vld [vmem:[%s1 + $0x260] sm:$0xff]
        %v391 = vld [vmem:[%s1 + $0x268] sm:$0xff]
        %v392 = vld [vmem:[%s1 + $0x270] sm:$0xff]
        %v393 = vld [vmem:[%s1 + $0x278] sm:$0xff]
        %v394 = vld [vmem:[%s1 + $0x280] sm:$0xff]
        %v395 = vld [vmem:[%s1 + $0x288] sm:$0xff]
        %v396 = vld [vmem:[%s1 + $0x290] sm:$0xff]
        %v397 = vld [vmem:[%s1 + $0x298] sm:$0xff]
        %v398 = vld [vmem:[%s1 + $0x2a0] sm:$0xff]
        %v399 = vld [vmem:[%s1 + $0x2a8] sm:$0xff]
        %v400 = vld [vmem:[%s1 + $0x2b0] sm:$0xff]
        %v401 = vld [vmem:[%s1 + $0x2b8] sm:$0xff]
        %v402 = vld [vmem:[%s1 + $0x2c0] sm:$0xff]
        %v403 = vld [vmem:[%s1 + $0x2c8] sm:$0xff]
        %v404 = vld [vmem:[%s1 + $0x2d0] sm:$0xff]
        %v405 = vld [vmem:[%s1 + $0x2d8] sm:$0xff]
        %v406 = vld [vmem:[%s1 + $0x2e0] sm:$0xff]
        %v407 = vld [vmem:[%s1 + $0x2e8] sm:$0xff]
        %v408 = vld [vmem:[%s1 + $0x2f0] sm:$0xff]
        %v409 = vld [vmem:[%s1 + $0x2f8] sm:$0xff]
        %v410 = vld [vmem:[%s1 + $0x300] sm:$0xff]
        %v411 = vld [vmem:[%s1 + $0x308] sm:$0xff]
        %v412 = vld [vmem:[%s1 + $0x310] sm:$0xff]
        %v413 = vld [vmem:[%s1 + $0x318] sm:$0xff]
        %v414 = vld [vmem:[%s1 + $0x320] sm:$0xff]
        %v415 = vld [vmem:[%s1 + $0x328] sm:$0xff]
        %v416 = vld [vmem:[%s1 + $0x330] sm:$0xff]
        %v417 = vld [vmem:[%s1 + $0x338] sm:$0xff]
        %v418 = vld [vmem:[%s1 + $0x340] sm:$0xff]
        %v419 = vld [vmem:[%s1 + $0x348] sm:$0xff]
        %v420 = vld [vmem:[%s1 + $0x350] sm:$0xff]
        %v421 = vld [vmem:[%s1 + $0x358] sm:$0xff]
        %v422 = vld [vmem:[%s1 + $0x360] sm:$0xff]
        %v423 = vld [vmem:[%s1 + $0x368] sm:$0xff]
        %v424 = vld [vmem:[%s1 + $0x370] sm:$0xff]
        %v425 = vld [vmem:[%s1 + $0x378] sm:$0xff]
        %v426 = vld [vmem:[%s1 + $0x380] sm:$0xff]
        %v427 = vld [vmem:[%s1 + $0x388] sm:$0xff]
        %v428 = vld [vmem:[%s1 + $0x390] sm:$0xff]
        %v429 = vld [vmem:[%s1 + $0x398] sm:$0xff]
        %v430 = vld [vmem:[%s1 + $0x3a0] sm:$0xff]
        %v431 = vld [vmem:[%s1 + $0x3a8] sm:$0xff]
        %v432 = vld [vmem:[%s1 + $0x3b0] sm:$0xff]
        %v433 = vld [vmem:[%s1 + $0x3b8] sm:$0xff]
        %v434 = vld [vmem:[%s1 + $0x3c0] sm:$0xff]
        %v435 = vld [vmem:[%s1 + $0x3c8] sm:$0xff]
        %v436 = vld [vmem:[%s1 + $0x3d0] sm:$0xff]
        %v437 = vld [vmem:[%s1 + $0x3d8] sm:$0xff]
        %v438 = vld [vmem:[%s1 + $0x3e0] sm:$0xff]
        %v439 = vld [vmem:[%s1 + $0x3e8] sm:$0xff]
        %v440 = vld [vmem:[%s1 + $0x3f0] sm:$0xff]
        %v441 = vld [vmem:[%s1 + $0x3f8] sm:$0xff]
        %v442 = vld [vmem:[%s2] sm:$0x1]
        %v444 = vlaneseq
        %v445 = vshrl.u32 %v444, 7
        %v446 = vsub.s32 0, %v445
        %v447 = vrot.slane %v442, %v446
        %v451 = vcombine.high %v312, %v312
        %v453 = vunpack.c.l.s4 1983009808
        %v454 = vunpack.c.0.s8 %v453
        %v455 = vlaneseq
        %v456 = vshrl.u32 %v455, 7
        %v457 = vsub.s32 %v454, %v456
        %v458 = vrot.slane %v312, %v457
        %v460 = vunpack.c.l.s4 1983009808
        %v461 = vunpack.c.0.s8 %v460
        %v462 = vlaneseq
        %v463 = vshrl.u32 %v462, 7
        %v464 = vsub.s32 %v461, %v463
        %v465 = vrot.slane %v451, %v464
        %v466 = vcombine.high %v458, %v458
        %v467 = vcombine.high %v465, %v465
        %v468 = vcombine.high %v313, %v313
        %v470 = vunpack.c.l.s4 1983009808
        %v471 = vunpack.c.0.s8 %v470
        %v472 = vlaneseq
        %v473 = vshrl.u32 %v472, 7
        %v474 = vsub.s32 %v471, %v473
        %v475 = vrot.slane %v313, %v474
        %v477 = vunpack.c.l.s4 1983009808
        %v478 = vunpack.c.0.s8 %v477
        %v479 = vlaneseq
        %v480 = vshrl.u32 %v479, 7
        %v481 = vsub.s32 %v478, %v480
        %v482 = vrot.slane %v468, %v481
        %v483 = vcombine.high %v475, %v475
        %v484 = vcombine.high %v482, %v482
        %493 = vmatprep.subr.mxu0 0.0
        %494 = vmatpush1.msra.mxu0 %v329
        %495 = vmatprep.subr.mxu0 0.0
        %496 = vmatpush1.msra.mxu0 %v328
        %497 = vmatprep.subr.mxu0 0.0
        %498 = vmatpush1.msra.mxu0 %v327
        %499 = vmatprep.subr.mxu0 0.0
        %500 = vmatpush1.msra.mxu0 %v326
        %501 = vmatprep.subr.mxu0 0.0
        %502 = vmatpush1.msra.mxu0 %v325
        %503 = vmatprep.subr.mxu0 0.0
        %504 = vmatpush1.msra.mxu0 %v324
        %505 = vmatprep.subr.mxu0 0.0
        %506 = vmatpush1.msra.mxu0 %v323
        %507 = vmatprep.subr.mxu0 0.0
        %508 = vmatpush1.msra.mxu0 %v322
        %509 = vmatprep.subr.mxu0 0.0
        %510 = vmatpush1.msra.mxu0 %v321
        %511 = vmatprep.subr.mxu0 0.0
        %512 = vmatpush1.msra.mxu0 %v320
        %513 = vmatprep.subr.mxu0 0.0
        %514 = vmatpush1.msra.mxu0 %v319
        %515 = vmatprep.subr.mxu0 0.0
        %516 = vmatpush1.msra.mxu0 %v318
        %517 = vmatprep.subr.mxu0 0.0
        %518 = vmatpush1.msra.mxu0 %v317
        %519 = vmatprep.subr.mxu0 0.0
        %520 = vmatpush1.msra.mxu0 %v316
        %521 = vmatprep.subr.mxu0 0.0
        %522 = vmatpush1.msra.mxu0 %v315
        %523 = vmatprep.subr.mxu0 0.0
        %524 = vmatpush1.msra.mxu0 %v314
        %525 = vmatprep.subr.mxu0 0.0
        %526 = vmatpush2.msra.mxu0 %v345
        %527 = vmatprep.subr.mxu0 0.0
        %528 = vmatpush2.msra.mxu0 %v344
        %529 = vmatprep.subr.mxu0 0.0
        %530 = vmatpush2.msra.mxu0 %v343
        %531 = vmatprep.subr.mxu0 0.0
        %532 = vmatpush2.msra.mxu0 %v342
        %533 = vmatprep.subr.mxu0 0.0
        %534 = vmatpush2.msra.mxu0 %v341
        %535 = vmatprep.subr.mxu0 0.0
        %536 = vmatpush2.msra.mxu0 %v340
        %537 = vmatprep.subr.mxu0 0.0
        %538 = vmatpush2.msra.mxu0 %v339
        %539 = vmatprep.subr.mxu0 0.0
        %540 = vmatpush2.msra.mxu0 %v338
        %541 = vmatprep.subr.mxu0 0.0
        %542 = vmatpush2.msra.mxu0 %v337
        %543 = vmatprep.subr.mxu0 0.0
        %544 = vmatpush2.msra.mxu0 %v336
        %545 = vmatprep.subr.mxu0 0.0
        %546 = vmatpush2.msra.mxu0 %v335
        %547 = vmatprep.subr.mxu0 0.0
        %548 = vmatpush2.msra.mxu0 %v334
        %549 = vmatprep.subr.mxu0 0.0
        %550 = vmatpush2.msra.mxu0 %v333
        %551 = vmatprep.subr.mxu0 0.0
        %552 = vmatpush2.msra.mxu0 %v332
        %553 = vmatprep.subr.mxu0 0.0
        %554 = vmatpush2.msra.mxu0 %v331
        %555 = vmatprep.subr.mxu0 0.0
        %556 = vmatpush2.msra.mxu0 %v330
        %557 = vmatprep.mubr.f32.mxu0 %v466
        %558 = vmatmul.mubr.f32.gmra.mxu0 %v458
        %v559 = vpop.f32.mrf.mxu0
        %v560 = vadd.f32 %v447, %v559
        %v561 = vpop.f32.mrf.mxu0
        %562 = vdwg.mxu0
        %563 = vmatprep.subr.mxu0 0.0
        %564 = vmatpush1.msra.mxu0 %v361
        %565 = vmatprep.subr.mxu0 0.0
        %566 = vmatpush1.msra.mxu0 %v360
        %567 = vmatprep.subr.mxu0 0.0
        %568 = vmatpush1.msra.mxu0 %v359
        %569 = vmatprep.subr.mxu0 0.0
        %570 = vmatpush1.msra.mxu0 %v358
        %571 = vmatprep.subr.mxu0 0.0
        %572 = vmatpush1.msra.mxu0 %v357
        %573 = vmatprep.subr.mxu0 0.0
        %574 = vmatpush1.msra.mxu0 %v356
        %575 = vmatprep.subr.mxu0 0.0
        %576 = vmatpush1.msra.mxu0 %v355
        %577 = vmatprep.subr.mxu0 0.0
        %578 = vmatpush1.msra.mxu0 %v354
        %579 = vmatprep.subr.mxu0 0.0
        %580 = vmatpush1.msra.mxu0 %v353
        %581 = vmatprep.subr.mxu0 0.0
        %582 = vmatpush1.msra.mxu0 %v352
        %583 = vmatprep.subr.mxu0 0.0
        %584 = vmatpush1.msra.mxu0 %v351
        %585 = vmatprep.subr.mxu0 0.0
        %586 = vmatpush1.msra.mxu0 %v350
        %587 = vmatprep.subr.mxu0 0.0
        %588 = vmatpush1.msra.mxu0 %v349
        %589 = vmatprep.subr.mxu0 0.0
        %590 = vmatpush1.msra.mxu0 %v348
        %591 = vmatprep.subr.mxu0 0.0
        %592 = vmatpush1.msra.mxu0 %v347
        %593 = vmatprep.subr.mxu0 0.0
        %594 = vmatpush1.msra.mxu0 %v346
        %595 = vmatprep.subr.mxu0 0.0
        %596 = vmatpush2.msra.mxu0 %v377
        %597 = vmatprep.subr.mxu0 0.0
        %598 = vmatpush2.msra.mxu0 %v376
        %599 = vmatprep.subr.mxu0 0.0
        %600 = vmatpush2.msra.mxu0 %v375
        %601 = vmatprep.subr.mxu0 0.0
        %602 = vmatpush2.msra.mxu0 %v374
        %603 = vmatprep.subr.mxu0 0.0
        %604 = vmatpush2.msra.mxu0 %v373
        %605 = vmatprep.subr.mxu0 0.0
        %606 = vmatpush2.msra.mxu0 %v372
        %607 = vmatprep.subr.mxu0 0.0
        %608 = vmatpush2.msra.mxu0 %v371
        %609 = vmatprep.subr.mxu0 0.0
        %610 = vmatpush2.msra.mxu0 %v370
        %611 = vmatprep.subr.mxu0 0.0
        %612 = vmatpush2.msra.mxu0 %v369
        %613 = vmatprep.subr.mxu0 0.0
        %614 = vmatpush2.msra.mxu0 %v368
        %615 = vmatprep.subr.mxu0 0.0
        %616 = vmatpush2.msra.mxu0 %v367
        %617 = vmatprep.subr.mxu0 0.0
        %618 = vmatpush2.msra.mxu0 %v366
        %619 = vmatprep.subr.mxu0 0.0
        %620 = vmatpush2.msra.mxu0 %v365
        %621 = vmatprep.subr.mxu0 0.0
        %622 = vmatpush2.msra.mxu0 %v364
        %623 = vmatprep.subr.mxu0 0.0
        %624 = vmatpush2.msra.mxu0 %v363
        %625 = vmatprep.subr.mxu0 0.0
        %626 = vmatpush2.msra.mxu0 %v362
        %627 = vmatprep.mubr.f32.mxu0 %v467
        %628 = vmatmul.mubr.f32.gmra.mxu0 %v465
        %v629 = vpop.f32.mrf.mxu0
        %v630 = vadd.f32 %v560, %v629
        %v631 = vpop.f32.mrf.mxu0
        %632 = vdwg.mxu0
        %633 = vmatprep.subr.mxu0 0.0
        %634 = vmatpush1.msra.mxu0 %v393
        %635 = vmatprep.subr.mxu0 0.0
        %636 = vmatpush1.msra.mxu0 %v392
        %637 = vmatprep.subr.mxu0 0.0
        %638 = vmatpush1.msra.mxu0 %v391
        %639 = vmatprep.subr.mxu0 0.0
        %640 = vmatpush1.msra.mxu0 %v390
        %641 = vmatprep.subr.mxu0 0.0
        %642 = vmatpush1.msra.mxu0 %v389
        %643 = vmatprep.subr.mxu0 0.0
        %644 = vmatpush1.msra.mxu0 %v388
        %645 = vmatprep.subr.mxu0 0.0
        %646 = vmatpush1.msra.mxu0 %v387
        %647 = vmatprep.subr.mxu0 0.0
        %648 = vmatpush1.msra.mxu0 %v386
        %649 = vmatprep.subr.mxu0 0.0
        %650 = vmatpush1.msra.mxu0 %v385
        %651 = vmatprep.subr.mxu0 0.0
        %652 = vmatpush1.msra.mxu0 %v384
        %653 = vmatprep.subr.mxu0 0.0
        %654 = vmatpush1.msra.mxu0 %v383
        %655 = vmatprep.subr.mxu0 0.0
        %656 = vmatpush1.msra.mxu0 %v382
        %657 = vmatprep.subr.mxu0 0.0
        %658 = vmatpush1.msra.mxu0 %v381
        %659 = vmatprep.subr.mxu0 0.0
        %660 = vmatpush1.msra.mxu0 %v380
        %661 = vmatprep.subr.mxu0 0.0
        %662 = vmatpush1.msra.mxu0 %v379
        %663 = vmatprep.subr.mxu0 0.0
        %664 = vmatpush1.msra.mxu0 %v378
        %665 = vmatprep.subr.mxu0 0.0
        %666 = vmatpush2.msra.mxu0 %v409
        %667 = vmatprep.subr.mxu0 0.0
        %668 = vmatpush2.msra.mxu0 %v408
        %669 = vmatprep.subr.mxu0 0.0
        %670 = vmatpush2.msra.mxu0 %v407
        %671 = vmatprep.subr.mxu0 0.0
        %672 = vmatpush2.msra.mxu0 %v406
        %673 = vmatprep.subr.mxu0 0.0
        %674 = vmatpush2.msra.mxu0 %v405
        %675 = vmatprep.subr.mxu0 0.0
        %676 = vmatpush2.msra.mxu0 %v404
        %677 = vmatprep.subr.mxu0 0.0
        %678 = vmatpush2.msra.mxu0 %v403
        %679 = vmatprep.subr.mxu0 0.0
        %680 = vmatpush2.msra.mxu0 %v402
        %681 = vmatprep.subr.mxu0 0.0
        %682 = vmatpush2.msra.mxu0 %v401
        %683 = vmatprep.subr.mxu0 0.0
        %684 = vmatpush2.msra.mxu0 %v400
        %685 = vmatprep.subr.mxu0 0.0
        %686 = vmatpush2.msra.mxu0 %v399
        %687 = vmatprep.subr.mxu0 0.0
        %688 = vmatpush2.msra.mxu0 %v398
        %689 = vmatprep.subr.mxu0 0.0
        %690 = vmatpush2.msra.mxu0 %v397
        %691 = vmatprep.subr.mxu0 0.0
        %692 = vmatpush2.msra.mxu0 %v396
        %693 = vmatprep.subr.mxu0 0.0
        %694 = vmatpush2.msra.mxu0 %v395
        %695 = vmatprep.subr.mxu0 0.0
        %696 = vmatpush2.msra.mxu0 %v394
        %697 = vmatprep.mubr.f32.mxu0 %v483
        %698 = vmatmul.mubr.f32.gmra.mxu0 %v475
        %v699 = vpop.f32.mrf.mxu0
        %v700 = vadd.f32 %v630, %v699
        %v701 = vpop.f32.mrf.mxu0
        %702 = vdwg.mxu0
        %703 = vmatprep.subr.mxu0 0.0
        %704 = vmatpush1.msra.mxu0 %v425
        %705 = vmatprep.subr.mxu0 0.0
        %706 = vmatpush1.msra.mxu0 %v424
        %707 = vmatprep.subr.mxu0 0.0
        %708 = vmatpush1.msra.mxu0 %v423
        %709 = vmatprep.subr.mxu0 0.0
        %710 = vmatpush1.msra.mxu0 %v422
        %711 = vmatprep.subr.mxu0 0.0
        %712 = vmatpush1.msra.mxu0 %v421
        %713 = vmatprep.subr.mxu0 0.0
        %714 = vmatpush1.msra.mxu0 %v420
        %715 = vmatprep.subr.mxu0 0.0
        %716 = vmatpush1.msra.mxu0 %v419
        %717 = vmatprep.subr.mxu0 0.0
        %718 = vmatpush1.msra.mxu0 %v418
        %719 = vmatprep.subr.mxu0 0.0
        %720 = vmatpush1.msra.mxu0 %v417
        %721 = vmatprep.subr.mxu0 0.0
        %722 = vmatpush1.msra.mxu0 %v416
        %723 = vmatprep.subr.mxu0 0.0
        %724 = vmatpush1.msra.mxu0 %v415
        %725 = vmatprep.subr.mxu0 0.0
        %726 = vmatpush1.msra.mxu0 %v414
        %727 = vmatprep.subr.mxu0 0.0
        %728 = vmatpush1.msra.mxu0 %v413
        %729 = vmatprep.subr.mxu0 0.0
        %730 = vmatpush1.msra.mxu0 %v412
        %731 = vmatprep.subr.mxu0 0.0
        %732 = vmatpush1.msra.mxu0 %v411
        %733 = vmatprep.subr.mxu0 0.0
        %734 = vmatpush1.msra.mxu0 %v410
        %735 = vmatprep.subr.mxu0 0.0
        %736 = vmatpush2.msra.mxu0 %v441
        %737 = vmatprep.subr.mxu0 0.0
        %738 = vmatpush2.msra.mxu0 %v440
        %739 = vmatprep.subr.mxu0 0.0
        %740 = vmatpush2.msra.mxu0 %v439
        %741 = vmatprep.subr.mxu0 0.0
        %742 = vmatpush2.msra.mxu0 %v438
        %743 = vmatprep.subr.mxu0 0.0
        %744 = vmatpush2.msra.mxu0 %v437
        %745 = vmatprep.subr.mxu0 0.0
        %746 = vmatpush2.msra.mxu0 %v436
        %747 = vmatprep.subr.mxu0 0.0
        %748 = vmatpush2.msra.mxu0 %v435
        %749 = vmatprep.subr.mxu0 0.0
        %750 = vmatpush2.msra.mxu0 %v434
        %751 = vmatprep.subr.mxu0 0.0
        %752 = vmatpush2.msra.mxu0 %v433
        %753 = vmatprep.subr.mxu0 0.0
        %754 = vmatpush2.msra.mxu0 %v432
        %755 = vmatprep.subr.mxu0 0.0
        %756 = vmatpush2.msra.mxu0 %v431
        %757 = vmatprep.subr.mxu0 0.0
        %758 = vmatpush2.msra.mxu0 %v430
        %759 = vmatprep.subr.mxu0 0.0
        %760 = vmatpush2.msra.mxu0 %v429
        %761 = vmatprep.subr.mxu0 0.0
        %762 = vmatpush2.msra.mxu0 %v428
        %763 = vmatprep.subr.mxu0 0.0
        %764 = vmatpush2.msra.mxu0 %v427
        %765 = vmatprep.subr.mxu0 0.0
        %766 = vmatpush2.msra.mxu0 %v426
        %767 = vmatprep.mubr.f32.mxu0 %v484
        %768 = vmatmul.mubr.f32.gmra.mxu0 %v482
        %v769 = vpop.f32.mrf.mxu0
        %v770 = vadd.f32 %v700, %v769
        %v771 = vpop.f32.mrf.mxu0
        %772 = vdwg.mxu0
        %v773 = vld [vmem:[%s266] sm:$0xff]
        %v774 = vld [vmem:[%s266 + $0x8] sm:$0xff]
        %v775 = vld [vmem:[%s266 + $0x10] sm:$0xff]
        %v776 = vld [vmem:[%s266 + $0x18] sm:$0xff]
        %v777 = vld [vmem:[%s266 + $0x20] sm:$0xff]
        %v778 = vld [vmem:[%s266 + $0x28] sm:$0xff]
        %v779 = vld [vmem:[%s266 + $0x30] sm:$0xff]
        %v780 = vld [vmem:[%s266 + $0x38] sm:$0xff]
        %v781 = vld [vmem:[%s309] sm:$0x3]
        %v783 = vlaneseq
        %v784 = vshrl.u32 %v783, 7
        %v785 = vsub.s32 0, %v784
        %v786 = vrot.slane %v781, %v785
        %v787 = vlaneseq
        %v788 = vshrl.u32 %v787, 7
        %v789 = vsub.s32 1, %v788
        %v790 = vrot.slane %v781, %v789
        %vm793 = vcmask 261120
        %v795 = vsel %vm793, %v770, 0
        %797 = vmatprep.subr.mxu0 0.0
        %798 = vmatpush1.msra.mxu0 0.0
        %799 = vmatprep.subr.mxu0 0.0
        %800 = vmatpush1.msra.mxu0 0.0
        %801 = vmatprep.subr.mxu0 0.0
        %802 = vmatpush1.msra.mxu0 0.0
        %803 = vmatprep.subr.mxu0 0.0
        %804 = vmatpush1.msra.mxu0 0.0
        %805 = vmatprep.subr.mxu0 0.0
        %806 = vmatpush1.msra.mxu0 0.0
        %807 = vmatprep.subr.mxu0 0.0
        %808 = vmatpush1.msra.mxu0 0.0
        %809 = vmatprep.subr.mxu0 0.0
        %810 = vmatpush1.msra.mxu0 0.0
        %811 = vmatprep.subr.mxu0 0.0
        %812 = vmatpush1.msra.mxu0 0.0
        %813 = vmatprep.subr.mxu0 0.0
        %814 = vmatpush1.msra.mxu0 0.0
        %815 = vmatprep.subr.mxu0 0.0
        %816 = vmatpush1.msra.mxu0 0.0
        %817 = vmatprep.subr.mxu0 0.0
        %818 = vmatpush1.msra.mxu0 0.0
        %819 = vmatprep.subr.mxu0 0.0
        %820 = vmatpush1.msra.mxu0 0.0
        %821 = vmatprep.subr.mxu0 %v780
        %822 = vmatpush1.msra.mxu0 %v779
        %823 = vmatprep.subr.mxu0 %v778
        %824 = vmatpush1.msra.mxu0 %v777
        %825 = vmatprep.subr.mxu0 %v776
        %826 = vmatpush1.msra.mxu0 %v775
        %827 = vmatprep.subr.mxu0 %v774
        %828 = vmatpush1.msra.mxu0 %v773
        %829 = vmatprep.subr.mxu0 0.0
        %830 = vmatpush2.msra.mxu0 0.0
        %831 = vmatprep.subr.mxu0 0.0
        %832 = vmatpush2.msra.mxu0 0.0
        %833 = vmatprep.subr.mxu0 0.0
        %834 = vmatpush2.msra.mxu0 0.0
        %835 = vmatprep.subr.mxu0 0.0
        %836 = vmatpush2.msra.mxu0 0.0
        %837 = vmatprep.subr.mxu0 0.0
        %838 = vmatpush2.msra.mxu0 0.0
        %839 = vmatprep.subr.mxu0 0.0
        %840 = vmatpush2.msra.mxu0 0.0
        %841 = vmatprep.subr.mxu0 0.0
        %842 = vmatpush2.msra.mxu0 0.0
        %843 = vmatprep.subr.mxu0 0.0
        %844 = vmatpush2.msra.mxu0 0.0
        %845 = vmatprep.subr.mxu0 0.0
        %846 = vmatpush2.msra.mxu0 0.0
        %847 = vmatprep.subr.mxu0 0.0
        %848 = vmatpush2.msra.mxu0 0.0
        %849 = vmatprep.subr.mxu0 0.0
        %850 = vmatpush2.msra.mxu0 0.0
        %851 = vmatprep.subr.mxu0 0.0
        %852 = vmatpush2.msra.mxu0 0.0
        %853 = vmatprep.subr.mxu0 0.0
        %854 = vmatpush2.msra.mxu0 0.0
        %855 = vmatprep.subr.mxu0 0.0
        %856 = vmatpush2.msra.mxu0 0.0
        %857 = vmatprep.subr.mxu0 0.0
        %858 = vmatpush2.msra.mxu0 0.0
        %859 = vmatprep.subr.mxu0 0.0
        %860 = vmatpush2.msra.mxu0 0.0
        %861 = vmatprep.mubr.f32.mxu0 0.0
        %862 = vmatmul.mubr.f32.gmra.mxu0 %v795
        %v863 = vpop.f32.mrf.mxu0
        %v864 = vadd.f32 %v786, %v863
        %v865 = vpop.f32.mrf.mxu0
        %v866 = vadd.f32 %v790, %v865
        %867 = vdwg.mxu0
        %v870 = vcombine.low %v864, %v866
        %v872 = vunpack.c.l.s4 1983009808
        %v873 = vunpack.c.0.s8 %v872
        %v874 = vlaneseq
        %v875 = vshrl.u32 %v874, 7
        %v876 = vsub.s32 %v873, %v875
        %v877 = vrot.slane %v870, %v876
        %879 = vst [vmem:[%s299] sm:$0xf] %v877
        %s880 = sand.u32 %s161, 1
        %s881 = scalar_lea.sflag [#allocation4], %s880
        %s882 = sand.u32 %s161, 1
        %s883 = smul.addr %s882, 4
        %s884 = scalar_lea.vmem [#allocation3], %s883
        // Predicated region
        $region64: #{tpu_custom_call.1} parent=58 // pred_check
          %p885 = pneg %p171
        $region65: #{tpu_custom_call.1} parent=58 // pred_check_branch
          %887 = sbr.rel (%p885) target = $region67
        $region66: #{tpu_custom_call.1} parent=58 // pred_region
          %s888 = smul.u32 2, %s24
          %s890 = ssub.s32 64, 64
          %891 = vsyncadd %s881, %s890
          %s892 = smul.addr %s23, 8
          %s893 = sadd.s32 %s888, %s892
          %s894 = smul.addr %s893, 32
          %s895 = scalar_lea.hbm %s5, %s894
          %s897 = sshll.u32 %s884, 4
          %s898 = int_to_ptr.vmem [resolvable:$true] %s897
          %900 = dma.vmem_to_hbm [thread:$0]  %s898, 64, %s895, %s881
        $region67: #{tpu_custom_call.1} parent=58 // pred_fallthru
          _
      $region59: #{tpu_custom_call.1} parent=5 // pred_fallthru
        _
      %p901 = scmp.le.s32.totalorder 2, %s14
      // Predicated region
      $region68: #{tpu_custom_call.1} parent=5 // pred_check
        %p902 = pneg %p901
      $region69: #{tpu_custom_call.1} parent=5 // pred_check_branch
        %904 = sbr.rel (%p902) target = $region71
      $region70: #{tpu_custom_call.1} parent=5 // pred_region
        %s905 = ssub.s32 %s14, 2
        // Predicated region
        $region72: #{tpu_custom_call.1} parent=70 // pred_check
          %p906 = pneg %p177
        $region73: #{tpu_custom_call.1} parent=70 // pred_check_branch
          %908 = sbr.rel (%p906) target = $region75
        $region74: #{tpu_custom_call.1} parent=70 // pred_region
          %s909 = sand.u32 %s162, 1
          %s910 = scalar_lea.sflag [#allocation4], %s909
          %s911 = sand.u32 %s162, 1
          %s912 = smul.addr %s911, 4
          %s913 = scalar_lea.vmem [#allocation3], %s912
          %914 = dma.done %s910, 64
        $region75: #{tpu_custom_call.1} parent=70 // pred_fallthru
          _
      $region71: #{tpu_custom_call.1} parent=5 // pred_fallthru
        _
    $region6: #{tpu_custom_call.1} parent=1 // loop_footer
      %s18 = sadd.s32 1, %s14
    $region7: #{tpu_custom_call.1} parent=1 // loop_footer_branch
      %13 = sbr.rel target = $region3
    $region8: #{tpu_custom_call.1} parent=1 // loop_exit
      _
    %915 = vsyncpa [#allocation4], 1
    %s916 = scalar_lea.sflag [#allocation4], 1
    %917 = vsyncpa %s916, 1

</llo_original>
